<compile_context>
chip_gen: v6e
topology: v6e:2x2x1
jax: 0.10.0
libtpu: 0.0.40
codegen_flags: <defaults>
</compile_context>

<pallas_src>
import functools

import jax
import jax.numpy as jnp
from jax import lax
from jax.experimental import pallas as pl
from jax.experimental.pallas import tpu as pltpu


def _round_up(x, m):
    return ((x + m - 1) // m) * m


def _lstm_kernel(lens_ref, gx_ref, w_hh_ref,
                 out_ref, ht_ref, ct_ref,
                 h_scr, c_scr, *, hidden_size, time_tile):
    """Grid = (batch_blocks, time_blocks); one grid step runs `time_tile` LSTM
    steps.  Recurrent state lives in VMEM scratch across time blocks."""
    tb = pl.program_id(1)
    n_tb = pl.num_programs(1)

    @pl.when(tb == 0)
    def _():
        # h0 = c0 = 0 (the `h0 is None` branch of the PyTorch forward).
        h_scr[...] = jnp.zeros_like(h_scr)
        c_scr[...] = jnp.zeros_like(c_scr)

    H = hidden_size
    lens = lens_ref[...]                      # (BB, 1) int32
    w_hh = w_hh_ref[...]                      # (H, 4H), gate-blocked columns
    t_base = tb * time_tile

    def step(i, carry):
        h_prev, c_prev = carry
        # Precomputed x-projection (+bias) plus the recurrent projection:
        # one MXU matmul per step on the serial critical path.
        gates = gx_ref[i] + jnp.dot(h_prev, w_hh,
                                    preferred_element_type=jnp.float32)
        # Gate slices are 128-lane aligned because H is padded per gate.
        i_g = jax.nn.sigmoid(gates[:, 0 * H:1 * H])
        f_g = jax.nn.sigmoid(gates[:, 1 * H:2 * H])
        g_g = jnp.tanh(gates[:, 2 * H:3 * H])
        o_g = jax.nn.sigmoid(gates[:, 3 * H:4 * H])
        c_new = f_g * c_prev + i_g * g_g
        h_new = o_g * jnp.tanh(c_new)
        valid = lens > (t_base + i)           # (BB, 1) PackedSequence mask
        h_next = jnp.where(valid, h_new, h_prev)
        c_next = jnp.where(valid, c_new, c_prev)
        out_ref[i] = jnp.where(valid, h_new, 0.0).astype(out_ref.dtype)
        return (h_next, c_next)

    h, c = lax.fori_loop(0, time_tile, step,
                         (h_scr[...], c_scr[...]), unroll=True)
    h_scr[...] = h
    c_scr[...] = c

    @pl.when(tb == n_tb - 1)
    def _():
        ht_ref[...] = h_scr[...].astype(ht_ref.dtype)
        ct_ref[...] = c_scr[...].astype(ct_ref.dtype)


def dynamic_lstm_forward(x, x_len, params, only_use_last_hidden_state=False,
                         max_len=None, time_tile=8, batch_tile=None):
    """x: (B, T, D) batch_first float32, x_len: (B,) int.

    Returns (out, (ht, ct)) exactly like DynamicLSTM.forward with default args.
    Pass `max_len` (== int(max(x_len))) as a static Python int to avoid a
    device->host sync and keep the wrapper jittable.
    """
    B, T, D = x.shape
    w_ih, w_hh, b_ih, b_hh = params            # (4H,D), (4H,H), (4H,), (4H,)
    H = w_hh.shape[1]
    f32 = jnp.float32

    # Lane/sublane-aligned padded sizes (per-gate H padding keeps slices aligned).
    H_pad = _round_up(H, 128)
    B_pad = _round_up(B, 8)
    T_pad = _round_up(T, time_tile)
    BB = B_pad if batch_tile is None else batch_tile
    assert B_pad % BB == 0 and BB % 8 == 0

    # Per-gate zero padding of the weights / bias (gate order: i, f, g, o).
    w_ih_g = jnp.pad(jnp.asarray(w_ih, f32).reshape(4, H, D),
                     ((0, 0), (0, H_pad - H), (0, 0)))
    w_hh_g = jnp.pad(jnp.asarray(w_hh, f32).reshape(4, H, H),
                     ((0, 0), (0, H_pad - H), (0, H_pad - H)))
    b_g = jnp.pad((jnp.asarray(b_ih, f32) + jnp.asarray(b_hh, f32)).reshape(4, H),
                  ((0, 0), (0, H_pad - H)))

    w_ih_t = jnp.transpose(w_ih_g, (2, 0, 1)).reshape(D, 4 * H_pad)       # (D, 4H)
    w_hh_t = jnp.transpose(w_hh_g, (2, 0, 1)).reshape(H_pad, 4 * H_pad)   # (H, 4H)
    bias = b_g.reshape(1, 1, 4 * H_pad)

    # Hoisted input projection: one big MXU matmul, fused with the
    # batch-first -> time-major transpose.  gates_x[t,b,:] = x[b,t,:] @ W_ih^T + b
    gates_x = jnp.einsum('btd,dg->tbg', x.astype(f32), w_ih_t,
                         precision=jax.lax.Precision.HIGHEST) + bias
    gates_x = jnp.pad(gates_x, ((0, T_pad - T), (0, B_pad - B), (0, 0)))

    lens = jnp.pad(x_len.astype(jnp.int32), (0, B_pad - B)).reshape(B_pad, 1)

    kernel = functools.partial(_lstm_kernel, hidden_size=H_pad,
                               time_tile=time_tile)

    out_tm, ht, ct = pl.pallas_call(
        kernel,
        out_shape=(jax.ShapeDtypeStruct((T_pad, B_pad, H_pad), f32),
                   jax.ShapeDtypeStruct((B_pad, H_pad), f32),
                   jax.ShapeDtypeStruct((B_pad, H_pad), f32)),
        grid_spec=pltpu.PrefetchScalarGridSpec(
            num_scalar_prefetch=0,
            grid=(B_pad // BB, T_pad // time_tile),
            in_specs=[
                pl.BlockSpec((BB, 1), lambda b, t: (b, 0)),                 # lengths
                pl.BlockSpec((time_tile, BB, 4 * H_pad),
                             lambda b, t: (t, b, 0)),                       # gates_x
                pl.BlockSpec((H_pad, 4 * H_pad), lambda b, t: (0, 0)),      # W_hh^T
            ],
            out_specs=[
                pl.BlockSpec((time_tile, BB, H_pad), lambda b, t: (t, b, 0)),  # out
                pl.BlockSpec((BB, H_pad), lambda b, t: (b, 0)),                # ht
                pl.BlockSpec((BB, H_pad), lambda b, t: (b, 0)),                # ct
            ],
            scratch_shapes=[pltpu.VMEM((BB, H_pad), f32),    # h state
                            pltpu.VMEM((BB, H_pad), f32)],   # c state
        ),
        compiler_params=pltpu.CompilerParams(
            dimension_semantics=("parallel", "arbitrary")),  # batch || , time seq
    )(lens, gates_x, w_hh_t)

    ht = ht[:B, :H][None]    # (1, B, H) == (num_layers * num_directions, B, H)
    ct = ct[:B, :H][None]
    if only_use_last_hidden_state:
        return ht

    if max_len is None:
        # pad_packed_sequence pads only up to max(x_len).  Prefer passing
        # `max_len` statically; this fallback forces a device->host sync.
        max_len = int(jax.device_get(jnp.max(x_len)))
    out = jnp.transpose(out_tm, (1, 0, 2))[:B, :max_len, :H]   # (B, max_len, H)
    return out, (ht, ct)


def _lstm_reference(x, x_len, params):
    """Pure-JAX reference (lax.scan) with identical masking semantics."""
    w_ih, w_hh, b_ih, b_hh = params
    B, T, D = x.shape
    H = w_hh.shape[1]
    hp = jax.lax.Precision.HIGHEST

    def step(carry, inputs):
        h, c = carry
        x_t, t = inputs
        gates = (jnp.dot(x_t, w_ih.T, precision=hp)
                 + jnp.dot(h, w_hh.T, precision=hp) + b_ih + b_hh)
        i, f, g, o = jnp.split(gates, 4, axis=-1)
        i, f, g, o = jax.nn.sigmoid(i), jax.nn.sigmoid(f), jnp.tanh(g), jax.nn.sigmoid(o)
        c_new = f * c + i * g
        h_new = o * jnp.tanh(c_new)
        valid = (x_len > t)[:, None]
        h = jnp.where(valid, h_new, h)
        c = jnp.where(valid, c_new, c)
        return (h, c), jnp.where(valid, h_new, 0.0)

    h0 = jnp.zeros((B, H), jnp.float32)
    c0 = jnp.zeros((B, H), jnp.float32)
    (hT, cT), outs = jax.lax.scan(
        step, (h0, c0),
        (jnp.transpose(x, (1, 0, 2)).astype(jnp.float32), jnp.arange(T)))
    return jnp.transpose(outs, (1, 0, 2)), hT[None], cT[None]


def init_lstm_params(key, input_size, hidden_size):
    """Deterministic init matching nn.LSTM's uniform(-1/sqrt(H), 1/sqrt(H))."""
    k = 1.0 / (hidden_size ** 0.5)
    k1, k2, k3, k4 = jax.random.split(key, 4)
    w_ih = jax.random.uniform(k1, (4 * hidden_size, input_size), jnp.float32, -k, k)
    w_hh = jax.random.uniform(k2, (4 * hidden_size, hidden_size), jnp.float32, -k, k)
    b_ih = jax.random.uniform(k3, (4 * hidden_size,), jnp.float32, -k, k)
    b_hh = jax.random.uniform(k4, (4 * hidden_size,), jnp.float32, -k, k)
    return w_ih, w_hh, b_ih, b_hh


if __name__ == "__main__":
    B, T, D, H = 2, 8, 16, 32

    key = jax.random.PRNGKey(0)
    kx, kp = jax.random.split(key)
    x = jax.random.normal(kx, (B, T, D), jnp.float32)
    lens_list = [8, 5]                                   # variable lengths, max == T
    x_len = jnp.array(lens_list, dtype=jnp.int32)
    params = init_lstm_params(kp, D, H)
    max_len = max(lens_list)                             # static, no device sync

    out, (ht, ct) = dynamic_lstm_forward(x, x_len, params, max_len=max_len)
    jax.block_until_ready((out, ht, ct))

    out_ref, ht_ref, ct_ref = _lstm_reference(x, x_len, params)
    assert out.shape == (B, max_len, H)
    assert ht.shape == (1, B, H) and ct.shape == (1, B, H)
    assert jnp.allclose(out, out_ref[:, :max_len], atol=2e-5, rtol=1e-4)
    assert jnp.allclose(ht, ht_ref, atol=2e-5, rtol=1e-4)
    assert jnp.allclose(ct, ct_ref, atol=2e-5, rtol=1e-4)

    print("KERNEL_OK")
</pallas_src>

<mosaic_0001>
module attributes {stable_mosaic.version = 11 : i64} {
  func.func @_lstm_kernel(%arg0: i32, %arg1: i32, %arg2: memref<8x1xi32, #tpu.memory_space<vmem>>, %arg3: memref<8x8x512xf32, #tpu.memory_space<vmem>>, %arg4: memref<128x512xf32, #tpu.memory_space<vmem>>, %arg5: memref<8x8x128xf32, #tpu.memory_space<vmem>>, %arg6: memref<8x128xf32, #tpu.memory_space<vmem>>, %arg7: memref<8x128xf32, #tpu.memory_space<vmem>>, %arg8: memref<8x128xf32, #tpu.memory_space<vmem>>, %arg9: memref<8x128xf32, #tpu.memory_space<vmem>>) attributes {dimension_semantics = [#tpu.dimension_semantics<parallel>, #tpu.dimension_semantics<arbitrary>], iteration_bounds = array<i64: 1, 1>, scalar_prefetch = 0 : i64, scratch_operands = 2 : i64, tpu.core_type = #tpu.core_type<tc>, window_params = [{transform_indices = @transform_0, window_bounds = array<i64: 8, 1>}, {transform_indices = @transform_1, window_bounds = array<i64: 8, 8, 512>}, {pipeline_mode = #tpu.pipeline_mode<synchronous>, transform_indices = @transform_2, window_bounds = array<i64: 128, 512>}, {transform_indices = @transform_3, window_bounds = array<i64: 8, 8, 128>}, {transform_indices = @transform_4, window_bounds = array<i64: 8, 128>}, {transform_indices = @transform_5, window_bounds = array<i64: 8, 128>}]} {
    %c0_i32 = arith.constant 0 : i32
    %0 = arith.cmpi eq, %arg1, %c0_i32 : i32
    %1 = arith.extui %0 : i1 to i32
    %c0_i32_0 = arith.constant 0 : i32
    %2 = arith.cmpi ne, %1, %c0_i32_0 : i32
    scf.if %2 {
      %cst_87 = arith.constant 0.000000e+00 : f32
      %389 = vector.broadcast %cst_87 : f32 to vector<8x128xf32>
      %c0_88 = arith.constant 0 : index
      %c0_89 = arith.constant 0 : index
      %390 = vector.load %arg8[%c0_88, %c0_89] : memref<8x128xf32, #tpu.memory_space<vmem>>, vector<8x128xf32>
      tpu.vector_store %arg8[%c0_88, %c0_89], %389 {strides = array<i32>} : memref<8x128xf32, #tpu.memory_space<vmem>>, vector<8x128xf32>,
      %cst_90 = arith.constant 0.000000e+00 : f32
      %391 = vector.broadcast %cst_90 : f32 to vector<8x128xf32>
      %c0_91 = arith.constant 0 : index
      %c0_92 = arith.constant 0 : index
      %392 = vector.load %arg9[%c0_91, %c0_92] : memref<8x128xf32, #tpu.memory_space<vmem>>, vector<8x128xf32>
      tpu.vector_store %arg9[%c0_91, %c0_92], %391 {strides = array<i32>} : memref<8x128xf32, #tpu.memory_space<vmem>>, vector<8x128xf32>,
    } else {
    }
    %c0 = arith.constant 0 : index
    %c0_1 = arith.constant 0 : index
    %3 = vector.load %arg2[%c0, %c0_1] : memref<8x1xi32, #tpu.memory_space<vmem>>, vector<8x1xi32>
    %c0_2 = arith.constant 0 : index
    %c0_3 = arith.constant 0 : index
    %4 = vector.load %arg4[%c0_2, %c0_3] : memref<128x512xf32, #tpu.memory_space<vmem>>, vector<128x512xf32>
    %c8_i32 = arith.constant 8 : i32
    %5 = arith.muli %arg1, %c8_i32 : i32
    %c0_4 = arith.constant 0 : index
    %c0_5 = arith.constant 0 : index
    %6 = vector.load %arg8[%c0_4, %c0_5] : memref<8x128xf32, #tpu.memory_space<vmem>>, vector<8x128xf32>
    %c0_6 = arith.constant 0 : index
    %c0_7 = arith.constant 0 : index
    %7 = vector.load %arg9[%c0_6, %c0_7] : memref<8x128xf32, #tpu.memory_space<vmem>>, vector<8x128xf32>
    %c0_i32_8 = arith.constant 0 : i32
    %8 = arith.index_cast %c0_i32_8 : i32 to index
    %c0_9 = arith.constant 0 : index
    %c0_10 = arith.constant 0 : index
    %9 = vector.load %arg3[%8, %c0_9, %c0_10] : memref<8x8x512xf32, #tpu.memory_space<vmem>>, vector<1x8x512xf32>
    %10 = vector.shape_cast %9 : vector<1x8x512xf32> to vector<8x512xf32>
    %cst = arith.constant dense<0.000000e+00> : vector<8x512xf32>
    %11 = tpu.matmul %6, %4, %cst {dimension_numbers = #tpu.dot_dimension_numbers<[1], [0], [0], [1], [0, 0, 1, 1], [], []>} : vector<8x128xf32>, vector<128x512xf32>, vector<8x512xf32> -> vector<8x512xf32>
    %12 = arith.addf %10, %11 : vector<8x512xf32>
    %13 = vector.extract_strided_slice %12 {offsets = [0, 0], sizes = [8, 128], strides = [1, 1]} : vector<8x512xf32> to vector<8x128xf32>
    %14 = arith.negf %13 : vector<8x128xf32>
    %15 = math.exp %14 : vector<8x128xf32>
    %cst_11 = arith.constant 1.000000e+00 : f32
    %16 = vector.broadcast %cst_11 : f32 to vector<8x128xf32>
    %17 = arith.addf %16, %15 : vector<8x128xf32>
    %18 = arith.divf %16, %17 : vector<8x128xf32>
    %19 = vector.extract_strided_slice %12 {offsets = [0, 128], sizes = [8, 128], strides = [1, 1]} : vector<8x512xf32> to vector<8x128xf32>
    %20 = arith.negf %19 : vector<8x128xf32>
    %21 = math.exp %20 : vector<8x128xf32>
    %cst_12 = arith.constant 1.000000e+00 : f32
    %22 = vector.broadcast %cst_12 : f32 to vector<8x128xf32>
    %23 = arith.addf %22, %21 : vector<8x128xf32>
    %24 = arith.divf %22, %23 : vector<8x128xf32>
    %25 = vector.extract_strided_slice %12 {offsets = [0, 256], sizes = [8, 128], strides = [1, 1]} : vector<8x512xf32> to vector<8x128xf32>
    %26 = math.tanh %25 : vector<8x128xf32>
    %27 = vector.extract_strided_slice %12 {offsets = [0, 384], sizes = [8, 128], strides = [1, 1]} : vector<8x512xf32> to vector<8x128xf32>
    %28 = arith.negf %27 : vector<8x128xf32>
    %29 = math.exp %28 : vector<8x128xf32>
    %cst_13 = arith.constant 1.000000e+00 : f32
    %30 = vector.broadcast %cst_13 : f32 to vector<8x128xf32>
    %31 = arith.addf %30, %29 : vector<8x128xf32>
    %32 = arith.divf %30, %31 : vector<8x128xf32>
    %33 = arith.mulf %24, %7 : vector<8x128xf32>
    %34 = arith.mulf %18, %26 : vector<8x128xf32>
    %35 = arith.addf %33, %34 : vector<8x128xf32>
    %36 = math.tanh %35 : vector<8x128xf32>
    %37 = arith.mulf %32, %36 : vector<8x128xf32>
    %38 = arith.addi %5, %c0_i32_8 : i32
    %39 = vector.broadcast %38 : i32 to vector<8x1xi32>
    %40 = arith.cmpi sgt, %3, %39 : vector<8x1xi32>
    %41 = vector.shape_cast %40 : vector<8x1xi1> to vector<8x1xi1>
    %42 = vector.broadcast %41 : vector<8x1xi1> to vector<8x128xi1>
    %43 = arith.select %42, %37, %6 : vector<8x128xi1>, vector<8x128xf32>
    %44 = vector.shape_cast %40 : vector<8x1xi1> to vector<8x1xi1>
    %45 = vector.broadcast %44 : vector<8x1xi1> to vector<8x128xi1>
    %46 = arith.select %45, %35, %7 : vector<8x128xi1>, vector<8x128xf32>
    %cst_14 = arith.constant 0.000000e+00 : f32
    %47 = vector.shape_cast %40 : vector<8x1xi1> to vector<8x1xi1>
    %48 = vector.broadcast %47 : vector<8x1xi1> to vector<8x128xi1>
    %49 = vector.broadcast %cst_14 : f32 to vector<8x128xf32>
    %50 = arith.select %48, %37, %49 : vector<8x128xi1>, vector<8x128xf32>
    %51 = arith.index_cast %c0_i32_8 : i32 to index
    %c0_15 = arith.constant 0 : index
    %c0_16 = arith.constant 0 : index
    %52 = vector.load %arg5[%51, %c0_15, %c0_16] : memref<8x8x128xf32, #tpu.memory_space<vmem>>, vector<1x8x128xf32>
    %53 = vector.shape_cast %52 : vector<1x8x128xf32> to vector<8x128xf32>
    %54 = vector.shape_cast %50 : vector<8x128xf32> to vector<1x8x128xf32>
    tpu.vector_store %arg5[%51, %c0_15, %c0_16], %54 {strides = array<i32>} : memref<8x8x128xf32, #tpu.memory_space<vmem>>, vector<1x8x128xf32>,
    %c1_i32 = arith.constant 1 : i32
    %55 = arith.index_cast %c1_i32 : i32 to index
    %c0_17 = arith.constant 0 : index
    %c0_18 = arith.constant 0 : index
    %56 = vector.load %arg3[%55, %c0_17, %c0_18] : memref<8x8x512xf32, #tpu.memory_space<vmem>>, vector<1x8x512xf32>
    %57 = vector.shape_cast %56 : vector<1x8x512xf32> to vector<8x512xf32>
    %cst_19 = arith.constant dense<0.000000e+00> : vector<8x512xf32>
    %58 = tpu.matmul %43, %4, %cst_19 {dimension_numbers = #tpu.dot_dimension_numbers<[1], [0], [0], [1], [0, 0, 1, 1], [], []>} : vector<8x128xf32>, vector<128x512xf32>, vector<8x512xf32> -> vector<8x512xf32>
    %59 = arith.addf %57, %58 : vector<8x512xf32>
    %60 = vector.extract_strided_slice %59 {offsets = [0, 0], sizes = [8, 128], strides = [1, 1]} : vector<8x512xf32> to vector<8x128xf32>
    %61 = arith.negf %60 : vector<8x128xf32>
    %62 = math.exp %61 : vector<8x128xf32>
    %cst_20 = arith.constant 1.000000e+00 : f32
    %63 = vector.broadcast %cst_20 : f32 to vector<8x128xf32>
    %64 = arith.addf %63, %62 : vector<8x128xf32>
    %65 = arith.divf %63, %64 : vector<8x128xf32>
    %66 = vector.extract_strided_slice %59 {offsets = [0, 128], sizes = [8, 128], strides = [1, 1]} : vector<8x512xf32> to vector<8x128xf32>
    %67 = arith.negf %66 : vector<8x128xf32>
    %68 = math.exp %67 : vector<8x128xf32>
    %cst_21 = arith.constant 1.000000e+00 : f32
    %69 = vector.broadcast %cst_21 : f32 to vector<8x128xf32>
    %70 = arith.addf %69, %68 : vector<8x128xf32>
    %71 = arith.divf %69, %70 : vector<8x128xf32>
    %72 = vector.extract_strided_slice %59 {offsets = [0, 256], sizes = [8, 128], strides = [1, 1]} : vector<8x512xf32> to vector<8x128xf32>
    %73 = math.tanh %72 : vector<8x128xf32>
    %74 = vector.extract_strided_slice %59 {offsets = [0, 384], sizes = [8, 128], strides = [1, 1]} : vector<8x512xf32> to vector<8x128xf32>
    %75 = arith.negf %74 : vector<8x128xf32>
    %76 = math.exp %75 : vector<8x128xf32>
    %cst_22 = arith.constant 1.000000e+00 : f32
    %77 = vector.broadcast %cst_22 : f32 to vector<8x128xf32>
    %78 = arith.addf %77, %76 : vector<8x128xf32>
    %79 = arith.divf %77, %78 : vector<8x128xf32>
    %80 = arith.mulf %71, %46 : vector<8x128xf32>
    %81 = arith.mulf %65, %73 : vector<8x128xf32>
    %82 = arith.addf %80, %81 : vector<8x128xf32>
    %83 = math.tanh %82 : vector<8x128xf32>
    %84 = arith.mulf %79, %83 : vector<8x128xf32>
    %85 = arith.addi %5, %c1_i32 : i32
    %86 = vector.broadcast %85 : i32 to vector<8x1xi32>
    %87 = arith.cmpi sgt, %3, %86 : vector<8x1xi32>
    %88 = vector.shape_cast %87 : vector<8x1xi1> to vector<8x1xi1>
    %89 = vector.broadcast %88 : vector<8x1xi1> to vector<8x128xi1>
    %90 = arith.select %89, %84, %43 : vector<8x128xi1>, vector<8x128xf32>
    %91 = vector.shape_cast %87 : vector<8x1xi1> to vector<8x1xi1>
    %92 = vector.broadcast %91 : vector<8x1xi1> to vector<8x128xi1>
    %93 = arith.select %92, %82, %46 : vector<8x128xi1>, vector<8x128xf32>
    %cst_23 = arith.constant 0.000000e+00 : f32
    %94 = vector.shape_cast %87 : vector<8x1xi1> to vector<8x1xi1>
    %95 = vector.broadcast %94 : vector<8x1xi1> to vector<8x128xi1>
    %96 = vector.broadcast %cst_23 : f32 to vector<8x128xf32>
    %97 = arith.select %95, %84, %96 : vector<8x128xi1>, vector<8x128xf32>
    %98 = arith.index_cast %c1_i32 : i32 to index
    %c0_24 = arith.constant 0 : index
    %c0_25 = arith.constant 0 : index
    %99 = vector.load %arg5[%98, %c0_24, %c0_25] : memref<8x8x128xf32, #tpu.memory_space<vmem>>, vector<1x8x128xf32>
    %100 = vector.shape_cast %99 : vector<1x8x128xf32> to vector<8x128xf32>
    %101 = vector.shape_cast %97 : vector<8x128xf32> to vector<1x8x128xf32>
    tpu.vector_store %arg5[%98, %c0_24, %c0_25], %101 {strides = array<i32>} : memref<8x8x128xf32, #tpu.memory_space<vmem>>, vector<1x8x128xf32>,
    %c2_i32 = arith.constant 2 : i32
    %102 = arith.index_cast %c2_i32 : i32 to index
    %c0_26 = arith.constant 0 : index
    %c0_27 = arith.constant 0 : index
    %103 = vector.load %arg3[%102, %c0_26, %c0_27] : memref<8x8x512xf32, #tpu.memory_space<vmem>>, vector<1x8x512xf32>
    %104 = vector.shape_cast %103 : vector<1x8x512xf32> to vector<8x512xf32>
    %cst_28 = arith.constant dense<0.000000e+00> : vector<8x512xf32>
    %105 = tpu.matmul %90, %4, %cst_28 {dimension_numbers = #tpu.dot_dimension_numbers<[1], [0], [0], [1], [0, 0, 1, 1], [], []>} : vector<8x128xf32>, vector<128x512xf32>, vector<8x512xf32> -> vector<8x512xf32>
    %106 = arith.addf %104, %105 : vector<8x512xf32>
    %107 = vector.extract_strided_slice %106 {offsets = [0, 0], sizes = [8, 128], strides = [1, 1]} : vector<8x512xf32> to vector<8x128xf32>
    %108 = arith.negf %107 : vector<8x128xf32>
    %109 = math.exp %108 : vector<8x128xf32>
    %cst_29 = arith.constant 1.000000e+00 : f32
    %110 = vector.broadcast %cst_29 : f32 to vector<8x128xf32>
    %111 = arith.addf %110, %109 : vector<8x128xf32>
    %112 = arith.divf %110, %111 : vector<8x128xf32>
    %113 = vector.extract_strided_slice %106 {offsets = [0, 128], sizes = [8, 128], strides = [1, 1]} : vector<8x512xf32> to vector<8x128xf32>
    %114 = arith.negf %113 : vector<8x128xf32>
    %115 = math.exp %114 : vector<8x128xf32>
    %cst_30 = arith.constant 1.000000e+00 : f32
    %116 = vector.broadcast %cst_30 : f32 to vector<8x128xf32>
    %117 = arith.addf %116, %115 : vector<8x128xf32>
    %118 = arith.divf %116, %117 : vector<8x128xf32>
    %119 = vector.extract_strided_slice %106 {offsets = [0, 256], sizes = [8, 128], strides = [1, 1]} : vector<8x512xf32> to vector<8x128xf32>
    %120 = math.tanh %119 : vector<8x128xf32>
    %121 = vector.extract_strided_slice %106 {offsets = [0, 384], sizes = [8, 128], strides = [1, 1]} : vector<8x512xf32> to vector<8x128xf32>
    %122 = arith.negf %121 : vector<8x128xf32>
    %123 = math.exp %122 : vector<8x128xf32>
    %cst_31 = arith.constant 1.000000e+00 : f32
    %124 = vector.broadcast %cst_31 : f32 to vector<8x128xf32>
    %125 = arith.addf %124, %123 : vector<8x128xf32>
    %126 = arith.divf %124, %125 : vector<8x128xf32>
    %127 = arith.mulf %118, %93 : vector<8x128xf32>
    %128 = arith.mulf %112, %120 : vector<8x128xf32>
    %129 = arith.addf %127, %128 : vector<8x128xf32>
    %130 = math.tanh %129 : vector<8x128xf32>
    %131 = arith.mulf %126, %130 : vector<8x128xf32>
    %132 = arith.addi %5, %c2_i32 : i32
    %133 = vector.broadcast %132 : i32 to vector<8x1xi32>
    %134 = arith.cmpi sgt, %3, %133 : vector<8x1xi32>
    %135 = vector.shape_cast %134 : vector<8x1xi1> to vector<8x1xi1>
    %136 = vector.broadcast %135 : vector<8x1xi1> to vector<8x128xi1>
    %137 = arith.select %136, %131, %90 : vector<8x128xi1>, vector<8x128xf32>
    %138 = vector.shape_cast %134 : vector<8x1xi1> to vector<8x1xi1>
    %139 = vector.broadcast %138 : vector<8x1xi1> to vector<8x128xi1>
    %140 = arith.select %139, %129, %93 : vector<8x128xi1>, vector<8x128xf32>
    %cst_32 = arith.constant 0.000000e+00 : f32
    %141 = vector.shape_cast %134 : vector<8x1xi1> to vector<8x1xi1>
    %142 = vector.broadcast %141 : vector<8x1xi1> to vector<8x128xi1>
    %143 = vector.broadcast %cst_32 : f32 to vector<8x128xf32>
    %144 = arith.select %142, %131, %143 : vector<8x128xi1>, vector<8x128xf32>
    %145 = arith.index_cast %c2_i32 : i32 to index
    %c0_33 = arith.constant 0 : index
    %c0_34 = arith.constant 0 : index
    %146 = vector.load %arg5[%145, %c0_33, %c0_34] : memref<8x8x128xf32, #tpu.memory_space<vmem>>, vector<1x8x128xf32>
    %147 = vector.shape_cast %146 : vector<1x8x128xf32> to vector<8x128xf32>
    %148 = vector.shape_cast %144 : vector<8x128xf32> to vector<1x8x128xf32>
    tpu.vector_store %arg5[%145, %c0_33, %c0_34], %148 {strides = array<i32>} : memref<8x8x128xf32, #tpu.memory_space<vmem>>, vector<1x8x128xf32>,
    %c3_i32 = arith.constant 3 : i32
    %149 = arith.index_cast %c3_i32 : i32 to index
    %c0_35 = arith.constant 0 : index
    %c0_36 = arith.constant 0 : index
    %150 = vector.load %arg3[%149, %c0_35, %c0_36] : memref<8x8x512xf32, #tpu.memory_space<vmem>>, vector<1x8x512xf32>
    %151 = vector.shape_cast %150 : vector<1x8x512xf32> to vector<8x512xf32>
    %cst_37 = arith.constant dense<0.000000e+00> : vector<8x512xf32>
    %152 = tpu.matmul %137, %4, %cst_37 {dimension_numbers = #tpu.dot_dimension_numbers<[1], [0], [0], [1], [0, 0, 1, 1], [], []>} : vector<8x128xf32>, vector<128x512xf32>, vector<8x512xf32> -> vector<8x512xf32>
    %153 = arith.addf %151, %152 : vector<8x512xf32>
    %154 = vector.extract_strided_slice %153 {offsets = [0, 0], sizes = [8, 128], strides = [1, 1]} : vector<8x512xf32> to vector<8x128xf32>
    %155 = arith.negf %154 : vector<8x128xf32>
    %156 = math.exp %155 : vector<8x128xf32>
    %cst_38 = arith.constant 1.000000e+00 : f32
    %157 = vector.broadcast %cst_38 : f32 to vector<8x128xf32>
    %158 = arith.addf %157, %156 : vector<8x128xf32>
    %159 = arith.divf %157, %158 : vector<8x128xf32>
    %160 = vector.extract_strided_slice %153 {offsets = [0, 128], sizes = [8, 128], strides = [1, 1]} : vector<8x512xf32> to vector<8x128xf32>
    %161 = arith.negf %160 : vector<8x128xf32>
    %162 = math.exp %161 : vector<8x128xf32>
    %cst_39 = arith.constant 1.000000e+00 : f32
    %163 = vector.broadcast %cst_39 : f32 to vector<8x128xf32>
    %164 = arith.addf %163, %162 : vector<8x128xf32>
    %165 = arith.divf %163, %164 : vector<8x128xf32>
    %166 = vector.extract_strided_slice %153 {offsets = [0, 256], sizes = [8, 128], strides = [1, 1]} : vector<8x512xf32> to vector<8x128xf32>
    %167 = math.tanh %166 : vector<8x128xf32>
    %168 = vector.extract_strided_slice %153 {offsets = [0, 384], sizes = [8, 128], strides = [1, 1]} : vector<8x512xf32> to vector<8x128xf32>
    %169 = arith.negf %168 : vector<8x128xf32>
    %170 = math.exp %169 : vector<8x128xf32>
    %cst_40 = arith.constant 1.000000e+00 : f32
    %171 = vector.broadcast %cst_40 : f32 to vector<8x128xf32>
    %172 = arith.addf %171, %170 : vector<8x128xf32>
    %173 = arith.divf %171, %172 : vector<8x128xf32>
    %174 = arith.mulf %165, %140 : vector<8x128xf32>
    %175 = arith.mulf %159, %167 : vector<8x128xf32>
    %176 = arith.addf %174, %175 : vector<8x128xf32>
    %177 = math.tanh %176 : vector<8x128xf32>
    %178 = arith.mulf %173, %177 : vector<8x128xf32>
    %179 = arith.addi %5, %c3_i32 : i32
    %180 = vector.broadcast %179 : i32 to vector<8x1xi32>
    %181 = arith.cmpi sgt, %3, %180 : vector<8x1xi32>
    %182 = vector.shape_cast %181 : vector<8x1xi1> to vector<8x1xi1>
    %183 = vector.broadcast %182 : vector<8x1xi1> to vector<8x128xi1>
    %184 = arith.select %183, %178, %137 : vector<8x128xi1>, vector<8x128xf32>
    %185 = vector.shape_cast %181 : vector<8x1xi1> to vector<8x1xi1>
    %186 = vector.broadcast %185 : vector<8x1xi1> to vector<8x128xi1>
    %187 = arith.select %186, %176, %140 : vector<8x128xi1>, vector<8x128xf32>
    %cst_41 = arith.constant 0.000000e+00 : f32
    %188 = vector.shape_cast %181 : vector<8x1xi1> to vector<8x1xi1>
    %189 = vector.broadcast %188 : vector<8x1xi1> to vector<8x128xi1>
    %190 = vector.broadcast %cst_41 : f32 to vector<8x128xf32>
    %191 = arith.select %189, %178, %190 : vector<8x128xi1>, vector<8x128xf32>
    %192 = arith.index_cast %c3_i32 : i32 to index
    %c0_42 = arith.constant 0 : index
    %c0_43 = arith.constant 0 : index
    %193 = vector.load %arg5[%192, %c0_42, %c0_43] : memref<8x8x128xf32, #tpu.memory_space<vmem>>, vector<1x8x128xf32>
    %194 = vector.shape_cast %193 : vector<1x8x128xf32> to vector<8x128xf32>
    %195 = vector.shape_cast %191 : vector<8x128xf32> to vector<1x8x128xf32>
    tpu.vector_store %arg5[%192, %c0_42, %c0_43], %195 {strides = array<i32>} : memref<8x8x128xf32, #tpu.memory_space<vmem>>, vector<1x8x128xf32>,
    %c4_i32 = arith.constant 4 : i32
    %196 = arith.index_cast %c4_i32 : i32 to index
    %c0_44 = arith.constant 0 : index
    %c0_45 = arith.constant 0 : index
    %197 = vector.load %arg3[%196, %c0_44, %c0_45] : memref<8x8x512xf32, #tpu.memory_space<vmem>>, vector<1x8x512xf32>
    %198 = vector.shape_cast %197 : vector<1x8x512xf32> to vector<8x512xf32>
    %cst_46 = arith.constant dense<0.000000e+00> : vector<8x512xf32>
    %199 = tpu.matmul %184, %4, %cst_46 {dimension_numbers = #tpu.dot_dimension_numbers<[1], [0], [0], [1], [0, 0, 1, 1], [], []>} : vector<8x128xf32>, vector<128x512xf32>, vector<8x512xf32> -> vector<8x512xf32>
    %200 = arith.addf %198, %199 : vector<8x512xf32>
    %201 = vector.extract_strided_slice %200 {offsets = [0, 0], sizes = [8, 128], strides = [1, 1]} : vector<8x512xf32> to vector<8x128xf32>
    %202 = arith.negf %201 : vector<8x128xf32>
    %203 = math.exp %202 : vector<8x128xf32>
    %cst_47 = arith.constant 1.000000e+00 : f32
    %204 = vector.broadcast %cst_47 : f32 to vector<8x128xf32>
    %205 = arith.addf %204, %203 : vector<8x128xf32>
    %206 = arith.divf %204, %205 : vector<8x128xf32>
    %207 = vector.extract_strided_slice %200 {offsets = [0, 128], sizes = [8, 128], strides = [1, 1]} : vector<8x512xf32> to vector<8x128xf32>
    %208 = arith.negf %207 : vector<8x128xf32>
    %209 = math.exp %208 : vector<8x128xf32>
    %cst_48 = arith.constant 1.000000e+00 : f32
    %210 = vector.broadcast %cst_48 : f32 to vector<8x128xf32>
    %211 = arith.addf %210, %209 : vector<8x128xf32>
    %212 = arith.divf %210, %211 : vector<8x128xf32>
    %213 = vector.extract_strided_slice %200 {offsets = [0, 256], sizes = [8, 128], strides = [1, 1]} : vector<8x512xf32> to vector<8x128xf32>
    %214 = math.tanh %213 : vector<8x128xf32>
    %215 = vector.extract_strided_slice %200 {offsets = [0, 384], sizes = [8, 128], strides = [1, 1]} : vector<8x512xf32> to vector<8x128xf32>
    %216 = arith.negf %215 : vector<8x128xf32>
    %217 = math.exp %216 : vector<8x128xf32>
    %cst_49 = arith.constant 1.000000e+00 : f32
    %218 = vector.broadcast %cst_49 : f32 to vector<8x128xf32>
    %219 = arith.addf %218, %217 : vector<8x128xf32>
    %220 = arith.divf %218, %219 : vector<8x128xf32>
    %221 = arith.mulf %212, %187 : vector<8x128xf32>
    %222 = arith.mulf %206, %214 : vector<8x128xf32>
    %223 = arith.addf %221, %222 : vector<8x128xf32>
    %224 = math.tanh %223 : vector<8x128xf32>
    %225 = arith.mulf %220, %224 : vector<8x128xf32>
    %226 = arith.addi %5, %c4_i32 : i32
    %227 = vector.broadcast %226 : i32 to vector<8x1xi32>
    %228 = arith.cmpi sgt, %3, %227 : vector<8x1xi32>
    %229 = vector.shape_cast %228 : vector<8x1xi1> to vector<8x1xi1>
    %230 = vector.broadcast %229 : vector<8x1xi1> to vector<8x128xi1>
    %231 = arith.select %230, %225, %184 : vector<8x128xi1>, vector<8x128xf32>
    %232 = vector.shape_cast %228 : vector<8x1xi1> to vector<8x1xi1>
    %233 = vector.broadcast %232 : vector<8x1xi1> to vector<8x128xi1>
    %234 = arith.select %233, %223, %187 : vector<8x128xi1>, vector<8x128xf32>
    %cst_50 = arith.constant 0.000000e+00 : f32
    %235 = vector.shape_cast %228 : vector<8x1xi1> to vector<8x1xi1>
    %236 = vector.broadcast %235 : vector<8x1xi1> to vector<8x128xi1>
    %237 = vector.broadcast %cst_50 : f32 to vector<8x128xf32>
    %238 = arith.select %236, %225, %237 : vector<8x128xi1>, vector<8x128xf32>
    %239 = arith.index_cast %c4_i32 : i32 to index
    %c0_51 = arith.constant 0 : index
    %c0_52 = arith.constant 0 : index
    %240 = vector.load %arg5[%239, %c0_51, %c0_52] : memref<8x8x128xf32, #tpu.memory_space<vmem>>, vector<1x8x128xf32>
    %241 = vector.shape_cast %240 : vector<1x8x128xf32> to vector<8x128xf32>
    %242 = vector.shape_cast %238 : vector<8x128xf32> to vector<1x8x128xf32>
    tpu.vector_store %arg5[%239, %c0_51, %c0_52], %242 {strides = array<i32>} : memref<8x8x128xf32, #tpu.memory_space<vmem>>, vector<1x8x128xf32>,
    %c5_i32 = arith.constant 5 : i32
    %243 = arith.index_cast %c5_i32 : i32 to index
    %c0_53 = arith.constant 0 : index
    %c0_54 = arith.constant 0 : index
    %244 = vector.load %arg3[%243, %c0_53, %c0_54] : memref<8x8x512xf32, #tpu.memory_space<vmem>>, vector<1x8x512xf32>
    %245 = vector.shape_cast %244 : vector<1x8x512xf32> to vector<8x512xf32>
    %cst_55 = arith.constant dense<0.000000e+00> : vector<8x512xf32>
    %246 = tpu.matmul %231, %4, %cst_55 {dimension_numbers = #tpu.dot_dimension_numbers<[1], [0], [0], [1], [0, 0, 1, 1], [], []>} : vector<8x128xf32>, vector<128x512xf32>, vector<8x512xf32> -> vector<8x512xf32>
    %247 = arith.addf %245, %246 : vector<8x512xf32>
    %248 = vector.extract_strided_slice %247 {offsets = [0, 0], sizes = [8, 128], strides = [1, 1]} : vector<8x512xf32> to vector<8x128xf32>
    %249 = arith.negf %248 : vector<8x128xf32>
    %250 = math.exp %249 : vector<8x128xf32>
    %cst_56 = arith.constant 1.000000e+00 : f32
    %251 = vector.broadcast %cst_56 : f32 to vector<8x128xf32>
    %252 = arith.addf %251, %250 : vector<8x128xf32>
    %253 = arith.divf %251, %252 : vector<8x128xf32>
    %254 = vector.extract_strided_slice %247 {offsets = [0, 128], sizes = [8, 128], strides = [1, 1]} : vector<8x512xf32> to vector<8x128xf32>
    %255 = arith.negf %254 : vector<8x128xf32>
    %256 = math.exp %255 : vector<8x128xf32>
    %cst_57 = arith.constant 1.000000e+00 : f32
    %257 = vector.broadcast %cst_57 : f32 to vector<8x128xf32>
    %258 = arith.addf %257, %256 : vector<8x128xf32>
    %259 = arith.divf %257, %258 : vector<8x128xf32>
    %260 = vector.extract_strided_slice %247 {offsets = [0, 256], sizes = [8, 128], strides = [1, 1]} : vector<8x512xf32> to vector<8x128xf32>
    %261 = math.tanh %260 : vector<8x128xf32>
    %262 = vector.extract_strided_slice %247 {offsets = [0, 384], sizes = [8, 128], strides = [1, 1]} : vector<8x512xf32> to vector<8x128xf32>
    %263 = arith.negf %262 : vector<8x128xf32>
    %264 = math.exp %263 : vector<8x128xf32>
    %cst_58 = arith.constant 1.000000e+00 : f32
    %265 = vector.broadcast %cst_58 : f32 to vector<8x128xf32>
    %266 = arith.addf %265, %264 : vector<8x128xf32>
    %267 = arith.divf %265, %266 : vector<8x128xf32>
    %268 = arith.mulf %259, %234 : vector<8x128xf32>
    %269 = arith.mulf %253, %261 : vector<8x128xf32>
    %270 = arith.addf %268, %269 : vector<8x128xf32>
    %271 = math.tanh %270 : vector<8x128xf32>
    %272 = arith.mulf %267, %271 : vector<8x128xf32>
    %273 = arith.addi %5, %c5_i32 : i32
    %274 = vector.broadcast %273 : i32 to vector<8x1xi32>
    %275 = arith.cmpi sgt, %3, %274 : vector<8x1xi32>
    %276 = vector.shape_cast %275 : vector<8x1xi1> to vector<8x1xi1>
    %277 = vector.broadcast %276 : vector<8x1xi1> to vector<8x128xi1>
    %278 = arith.select %277, %272, %231 : vector<8x128xi1>, vector<8x128xf32>
    %279 = vector.shape_cast %275 : vector<8x1xi1> to vector<8x1xi1>
    %280 = vector.broadcast %279 : vector<8x1xi1> to vector<8x128xi1>
    %281 = arith.select %280, %270, %234 : vector<8x128xi1>, vector<8x128xf32>
    %cst_59 = arith.constant 0.000000e+00 : f32
    %282 = vector.shape_cast %275 : vector<8x1xi1> to vector<8x1xi1>
    %283 = vector.broadcast %282 : vector<8x1xi1> to vector<8x128xi1>
    %284 = vector.broadcast %cst_59 : f32 to vector<8x128xf32>
    %285 = arith.select %283, %272, %284 : vector<8x128xi1>, vector<8x128xf32>
    %286 = arith.index_cast %c5_i32 : i32 to index
    %c0_60 = arith.constant 0 : index
    %c0_61 = arith.constant 0 : index
    %287 = vector.load %arg5[%286, %c0_60, %c0_61] : memref<8x8x128xf32, #tpu.memory_space<vmem>>, vector<1x8x128xf32>
    %288 = vector.shape_cast %287 : vector<1x8x128xf32> to vector<8x128xf32>
    %289 = vector.shape_cast %285 : vector<8x128xf32> to vector<1x8x128xf32>
    tpu.vector_store %arg5[%286, %c0_60, %c0_61], %289 {strides = array<i32>} : memref<8x8x128xf32, #tpu.memory_space<vmem>>, vector<1x8x128xf32>,
    %c6_i32 = arith.constant 6 : i32
    %290 = arith.index_cast %c6_i32 : i32 to index
    %c0_62 = arith.constant 0 : index
    %c0_63 = arith.constant 0 : index
    %291 = vector.load %arg3[%290, %c0_62, %c0_63] : memref<8x8x512xf32, #tpu.memory_space<vmem>>, vector<1x8x512xf32>
    %292 = vector.shape_cast %291 : vector<1x8x512xf32> to vector<8x512xf32>
    %cst_64 = arith.constant dense<0.000000e+00> : vector<8x512xf32>
    %293 = tpu.matmul %278, %4, %cst_64 {dimension_numbers = #tpu.dot_dimension_numbers<[1], [0], [0], [1], [0, 0, 1, 1], [], []>} : vector<8x128xf32>, vector<128x512xf32>, vector<8x512xf32> -> vector<8x512xf32>
    %294 = arith.addf %292, %293 : vector<8x512xf32>
    %295 = vector.extract_strided_slice %294 {offsets = [0, 0], sizes = [8, 128], strides = [1, 1]} : vector<8x512xf32> to vector<8x128xf32>
    %296 = arith.negf %295 : vector<8x128xf32>
    %297 = math.exp %296 : vector<8x128xf32>
    %cst_65 = arith.constant 1.000000e+00 : f32
    %298 = vector.broadcast %cst_65 : f32 to vector<8x128xf32>
    %299 = arith.addf %298, %297 : vector<8x128xf32>
    %300 = arith.divf %298, %299 : vector<8x128xf32>
    %301 = vector.extract_strided_slice %294 {offsets = [0, 128], sizes = [8, 128], strides = [1, 1]} : vector<8x512xf32> to vector<8x128xf32>
    %302 = arith.negf %301 : vector<8x128xf32>
    %303 = math.exp %302 : vector<8x128xf32>
    %cst_66 = arith.constant 1.000000e+00 : f32
    %304 = vector.broadcast %cst_66 : f32 to vector<8x128xf32>
    %305 = arith.addf %304, %303 : vector<8x128xf32>
    %306 = arith.divf %304, %305 : vector<8x128xf32>
    %307 = vector.extract_strided_slice %294 {offsets = [0, 256], sizes = [8, 128], strides = [1, 1]} : vector<8x512xf32> to vector<8x128xf32>
    %308 = math.tanh %307 : vector<8x128xf32>
    %309 = vector.extract_strided_slice %294 {offsets = [0, 384], sizes = [8, 128], strides = [1, 1]} : vector<8x512xf32> to vector<8x128xf32>
    %310 = arith.negf %309 : vector<8x128xf32>
    %311 = math.exp %310 : vector<8x128xf32>
    %cst_67 = arith.constant 1.000000e+00 : f32
    %312 = vector.broadcast %cst_67 : f32 to vector<8x128xf32>
    %313 = arith.addf %312, %311 : vector<8x128xf32>
    %314 = arith.divf %312, %313 : vector<8x128xf32>
    %315 = arith.mulf %306, %281 : vector<8x128xf32>
    %316 = arith.mulf %300, %308 : vector<8x128xf32>
    %317 = arith.addf %315, %316 : vector<8x128xf32>
    %318 = math.tanh %317 : vector<8x128xf32>
    %319 = arith.mulf %314, %318 : vector<8x128xf32>
    %320 = arith.addi %5, %c6_i32 : i32
    %321 = vector.broadcast %320 : i32 to vector<8x1xi32>
    %322 = arith.cmpi sgt, %3, %321 : vector<8x1xi32>
    %323 = vector.shape_cast %322 : vector<8x1xi1> to vector<8x1xi1>
    %324 = vector.broadcast %323 : vector<8x1xi1> to vector<8x128xi1>
    %325 = arith.select %324, %319, %278 : vector<8x128xi1>, vector<8x128xf32>
    %326 = vector.shape_cast %322 : vector<8x1xi1> to vector<8x1xi1>
    %327 = vector.broadcast %326 : vector<8x1xi1> to vector<8x128xi1>
    %328 = arith.select %327, %317, %281 : vector<8x128xi1>, vector<8x128xf32>
    %cst_68 = arith.constant 0.000000e+00 : f32
    %329 = vector.shape_cast %322 : vector<8x1xi1> to vector<8x1xi1>
    %330 = vector.broadcast %329 : vector<8x1xi1> to vector<8x128xi1>
    %331 = vector.broadcast %cst_68 : f32 to vector<8x128xf32>
    %332 = arith.select %330, %319, %331 : vector<8x128xi1>, vector<8x128xf32>
    %333 = arith.index_cast %c6_i32 : i32 to index
    %c0_69 = arith.constant 0 : index
    %c0_70 = arith.constant 0 : index
    %334 = vector.load %arg5[%333, %c0_69, %c0_70] : memref<8x8x128xf32, #tpu.memory_space<vmem>>, vector<1x8x128xf32>
    %335 = vector.shape_cast %334 : vector<1x8x128xf32> to vector<8x128xf32>
    %336 = vector.shape_cast %332 : vector<8x128xf32> to vector<1x8x128xf32>
    tpu.vector_store %arg5[%333, %c0_69, %c0_70], %336 {strides = array<i32>} : memref<8x8x128xf32, #tpu.memory_space<vmem>>, vector<1x8x128xf32>,
    %c7_i32 = arith.constant 7 : i32
    %337 = arith.index_cast %c7_i32 : i32 to index
    %c0_71 = arith.constant 0 : index
    %c0_72 = arith.constant 0 : index
    %338 = vector.load %arg3[%337, %c0_71, %c0_72] : memref<8x8x512xf32, #tpu.memory_space<vmem>>, vector<1x8x512xf32>
    %339 = vector.shape_cast %338 : vector<1x8x512xf32> to vector<8x512xf32>
    %cst_73 = arith.constant dense<0.000000e+00> : vector<8x512xf32>
    %340 = tpu.matmul %325, %4, %cst_73 {dimension_numbers = #tpu.dot_dimension_numbers<[1], [0], [0], [1], [0, 0, 1, 1], [], []>} : vector<8x128xf32>, vector<128x512xf32>, vector<8x512xf32> -> vector<8x512xf32>
    %341 = arith.addf %339, %340 : vector<8x512xf32>
    %342 = vector.extract_strided_slice %341 {offsets = [0, 0], sizes = [8, 128], strides = [1, 1]} : vector<8x512xf32> to vector<8x128xf32>
    %343 = arith.negf %342 : vector<8x128xf32>
    %344 = math.exp %343 : vector<8x128xf32>
    %cst_74 = arith.constant 1.000000e+00 : f32
    %345 = vector.broadcast %cst_74 : f32 to vector<8x128xf32>
    %346 = arith.addf %345, %344 : vector<8x128xf32>
    %347 = arith.divf %345, %346 : vector<8x128xf32>
    %348 = vector.extract_strided_slice %341 {offsets = [0, 128], sizes = [8, 128], strides = [1, 1]} : vector<8x512xf32> to vector<8x128xf32>
    %349 = arith.negf %348 : vector<8x128xf32>
    %350 = math.exp %349 : vector<8x128xf32>
    %cst_75 = arith.constant 1.000000e+00 : f32
    %351 = vector.broadcast %cst_75 : f32 to vector<8x128xf32>
    %352 = arith.addf %351, %350 : vector<8x128xf32>
    %353 = arith.divf %351, %352 : vector<8x128xf32>
    %354 = vector.extract_strided_slice %341 {offsets = [0, 256], sizes = [8, 128], strides = [1, 1]} : vector<8x512xf32> to vector<8x128xf32>
    %355 = math.tanh %354 : vector<8x128xf32>
    %356 = vector.extract_strided_slice %341 {offsets = [0, 384], sizes = [8, 128], strides = [1, 1]} : vector<8x512xf32> to vector<8x128xf32>
    %357 = arith.negf %356 : vector<8x128xf32>
    %358 = math.exp %357 : vector<8x128xf32>
    %cst_76 = arith.constant 1.000000e+00 : f32
    %359 = vector.broadcast %cst_76 : f32 to vector<8x128xf32>
    %360 = arith.addf %359, %358 : vector<8x128xf32>
    %361 = arith.divf %359, %360 : vector<8x128xf32>
    %362 = arith.mulf %353, %328 : vector<8x128xf32>
    %363 = arith.mulf %347, %355 : vector<8x128xf32>
    %364 = arith.addf %362, %363 : vector<8x128xf32>
    %365 = math.tanh %364 : vector<8x128xf32>
    %366 = arith.mulf %361, %365 : vector<8x128xf32>
    %367 = arith.addi %5, %c7_i32 : i32
    %368 = vector.broadcast %367 : i32 to vector<8x1xi32>
    %369 = arith.cmpi sgt, %3, %368 : vector<8x1xi32>
    %370 = vector.shape_cast %369 : vector<8x1xi1> to vector<8x1xi1>
    %371 = vector.broadcast %370 : vector<8x1xi1> to vector<8x128xi1>
    %372 = arith.select %371, %366, %325 : vector<8x128xi1>, vector<8x128xf32>
    %373 = vector.shape_cast %369 : vector<8x1xi1> to vector<8x1xi1>
    %374 = vector.broadcast %373 : vector<8x1xi1> to vector<8x128xi1>
    %375 = arith.select %374, %364, %328 : vector<8x128xi1>, vector<8x128xf32>
    %cst_77 = arith.constant 0.000000e+00 : f32
    %376 = vector.shape_cast %369 : vector<8x1xi1> to vector<8x1xi1>
    %377 = vector.broadcast %376 : vector<8x1xi1> to vector<8x128xi1>
    %378 = vector.broadcast %cst_77 : f32 to vector<8x128xf32>
    %379 = arith.select %377, %366, %378 : vector<8x128xi1>, vector<8x128xf32>
    %380 = arith.index_cast %c7_i32 : i32 to index
    %c0_78 = arith.constant 0 : index
    %c0_79 = arith.constant 0 : index
    %381 = vector.load %arg5[%380, %c0_78, %c0_79] : memref<8x8x128xf32, #tpu.memory_space<vmem>>, vector<1x8x128xf32>
    %382 = vector.shape_cast %381 : vector<1x8x128xf32> to vector<8x128xf32>
    %383 = vector.shape_cast %379 : vector<8x128xf32> to vector<1x8x128xf32>
    tpu.vector_store %arg5[%380, %c0_78, %c0_79], %383 {strides = array<i32>} : memref<8x8x128xf32, #tpu.memory_space<vmem>>, vector<1x8x128xf32>,
    %c8_i32_80 = arith.constant 8 : i32
    %c0_81 = arith.constant 0 : index
    %c0_82 = arith.constant 0 : index
    %384 = vector.load %arg8[%c0_81, %c0_82] : memref<8x128xf32, #tpu.memory_space<vmem>>, vector<8x128xf32>
    tpu.vector_store %arg8[%c0_81, %c0_82], %372 {strides = array<i32>} : memref<8x128xf32, #tpu.memory_space<vmem>>, vector<8x128xf32>,
    %c0_83 = arith.constant 0 : index
    %c0_84 = arith.constant 0 : index
    %385 = vector.load %arg9[%c0_83, %c0_84] : memref<8x128xf32, #tpu.memory_space<vmem>>, vector<8x128xf32>
    tpu.vector_store %arg9[%c0_83, %c0_84], %375 {strides = array<i32>} : memref<8x128xf32, #tpu.memory_space<vmem>>, vector<8x128xf32>,
    %c0_i32_85 = arith.constant 0 : i32
    %386 = arith.cmpi eq, %arg1, %c0_i32_85 : i32
    %387 = arith.extui %386 : i1 to i32
    %c0_i32_86 = arith.constant 0 : i32
    %388 = arith.cmpi ne, %387, %c0_i32_86 : i32
    scf.if %388 {
      %c0_87 = arith.constant 0 : index
      %c0_88 = arith.constant 0 : index
      %389 = vector.load %arg8[%c0_87, %c0_88] : memref<8x128xf32, #tpu.memory_space<vmem>>, vector<8x128xf32>
      %c0_89 = arith.constant 0 : index
      %c0_90 = arith.constant 0 : index
      %390 = vector.load %arg6[%c0_89, %c0_90] : memref<8x128xf32, #tpu.memory_space<vmem>>, vector<8x128xf32>
      tpu.vector_store %arg6[%c0_89, %c0_90], %389 {strides = array<i32>} : memref<8x128xf32, #tpu.memory_space<vmem>>, vector<8x128xf32>,
      %c0_91 = arith.constant 0 : index
      %c0_92 = arith.constant 0 : index
      %391 = vector.load %arg9[%c0_91, %c0_92] : memref<8x128xf32, #tpu.memory_space<vmem>>, vector<8x128xf32>
      %c0_93 = arith.constant 0 : index
      %c0_94 = arith.constant 0 : index
      %392 = vector.load %arg7[%c0_93, %c0_94] : memref<8x128xf32, #tpu.memory_space<vmem>>, vector<8x128xf32>
      tpu.vector_store %arg7[%c0_93, %c0_94], %391 {strides = array<i32>} : memref<8x128xf32, #tpu.memory_space<vmem>>, vector<8x128xf32>,
    } else {
    }
    return
  }
  func.func @transform_0(%arg0: i32, %arg1: i32) -> (i32, i32) {
    %c0_i32 = arith.constant 0 : i32
    %c0_i32_0 = arith.constant 0 : i32
    return %arg0, %c0_i32 : i32, i32
  }
  func.func @transform_1(%arg0: i32, %arg1: i32) -> (i32, i32, i32) {
    %c0_i32 = arith.constant 0 : i32
    %c0_i32_0 = arith.constant 0 : i32
    return %arg1, %arg0, %c0_i32 : i32, i32, i32
  }
  func.func @transform_2(%arg0: i32, %arg1: i32) -> (i32, i32) {
    %c0_i32 = arith.constant 0 : i32
    %c0_i32_0 = arith.constant 0 : i32
    %c0_i32_1 = arith.constant 0 : i32
    return %c0_i32, %c0_i32_0 : i32, i32
  }
  func.func @transform_3(%arg0: i32, %arg1: i32) -> (i32, i32, i32) {
    %c0_i32 = arith.constant 0 : i32
    %c0_i32_0 = arith.constant 0 : i32
    return %arg1, %arg0, %c0_i32 : i32, i32, i32
  }
  func.func @transform_4(%arg0: i32, %arg1: i32) -> (i32, i32) {
    %c0_i32 = arith.constant 0 : i32
    %c0_i32_0 = arith.constant 0 : i32
    return %arg0, %c0_i32 : i32, i32
  }
  func.func @transform_5(%arg0: i32, %arg1: i32) -> (i32, i32) {
    %c0_i32 = arith.constant 0 : i32
    %c0_i32_0 = arith.constant 0 : i32
    return %arg0, %c0_i32 : i32, i32
  }
}

</mosaic_0001>

<llo_original>
// kernel: tpu_custom_call.1
$region0: #{tpu_custom_call.1}
  #allocation0 [shape = 'u32[]', space=smem, size = 0x4, offset = 0x4, fixed_abs, tag = 'smem constant byte address 0x4 - core index']
  #allocation1 [shape = 'u32[144,128]{1,0:T(1,128)}', space=vmem, size = 0x12000, scoped, tag = 'internal scratch']
  #allocation2 [shape = 'f32[8,128]{1,0:T(8,128)}', space=vmem, size = 0x1000, scoped, tag = 'scratch operand']
  #allocation3 [shape = 'f32[8,128]{1,0:T(8,128)}', space=vmem, size = 0x1000, scoped, tag = 'scratch operand']
  %s0 = inlined_call_operand.vmem [shape: s32[8,1], index: 0, kind: input, shape index: {}]
  %s1 = inlined_call_operand.hbm [shape: f32[8,8,512], index: 1, kind: input, shape index: {}]
  %s2 = inlined_call_operand.hbm [shape: f32[128,512], index: 2, kind: input, shape index: {}]
  %s3 = inlined_call_operand.hbm [shape: f32[8,8,128], index: 3, kind: output, shape index: {0}]
  %s4 = inlined_call_operand.hbm [shape: f32[8,128], index: 4, kind: output, shape index: {1}]
  %s5 = inlined_call_operand.hbm [shape: f32[8,128], index: 5, kind: output, shape index: {2}]
  %6 = xla_tuple %s3, %s4, %s5
  %s7 = sld [smem:[#allocation0]]
  $region54: #{tpu_custom_call.1} parent=0
    _
  %s9 = ssub.s32 1, %s7
  %s10 = scalar_select 0, %s9, %s7
  $region1: #{tpu_custom_call.1} parent=0
    #allocation4 [shape = 'u8[131072]{0}', space=vmem, size = 0x20000, scoped, tag = 'input window, operand 1, single buffered']
    #allocation5 [shape = 's32[1]{0}', space=sflag, size = 0x4, scoped, tag = 'scoped memory for tpu_custom_call.1']
    #allocation6 [shape = 's32[1]{0}', space=sflag, size = 0x4, scoped, tag = 'scoped memory for tpu_custom_call.1']
    #allocation7 [shape = 'u8[262144]{0}', space=vmem, size = 0x40000, scoped, tag = 'input window, operand 2, single buffered']
    #allocation8 [shape = 's32[1]{0}', space=sflag, size = 0x4, scoped, tag = 'scoped memory for tpu_custom_call.1']
    #allocation9 [shape = 'u8[32768]{0}', space=vmem, size = 0x8000, scoped, tag = 'output window, operand 0, single buffered']
    #allocation10 [shape = 'u8[4096]{0}', space=vmem, size = 0x1000, scoped, tag = 'output window, operand 1, single buffered']
    #allocation11 [shape = 's32[1]{0}', space=sflag, size = 0x4, scoped, tag = 'scoped memory for tpu_custom_call.1']
    #allocation12 [shape = 'u8[4096]{0}', space=vmem, size = 0x1000, scoped, tag = 'output window, operand 2, single buffered']
    %11 = vsyncpa [#allocation5], 0
    %12 = vsyncpa [#allocation8], 0
    %13 = vsyncpa [#allocation6], 0
    %14 = vsyncpa [#allocation11], 0
    // Predicated region
    $region2: #{tpu_custom_call.1} parent=1 // pred_check
      _
    $region3: #{tpu_custom_call.1} parent=1 // pred_check_branch
      %16 = sbr.rel (0) target = $region5
    $region4: #{tpu_custom_call.1} parent=1 // pred_region
      _
    $region5: #{tpu_custom_call.1} parent=1 // pred_fallthru
      _
    // Predicated region
    $region6: #{tpu_custom_call.1} parent=1 // pred_check
      _
    $region7: #{tpu_custom_call.1} parent=1 // pred_check_branch
      %18 = sbr.rel (0) target = $region9
    $region8: #{tpu_custom_call.1} parent=1 // pred_region
      %s20 = ssub.s32 4096, 4096
      %21 = vsyncadd [#allocation5], %s20
      %s22 = sshll.u32 [#allocation4], 4
      %s23 = int_to_ptr.vmem [resolvable:$true] %s22
      %28 = dma.hbm_to_vmem [thread:$0]  %s1, 4096, %s23, [#allocation5], 512, 512, 32
    $region9: #{tpu_custom_call.1} parent=1 // pred_fallthru
      _
    // Predicated region
    $region10: #{tpu_custom_call.1} parent=1 // pred_check
      _
    $region11: #{tpu_custom_call.1} parent=1 // pred_check_branch
      %30 = sbr.rel (0) target = $region13
    $region12: #{tpu_custom_call.1} parent=1 // pred_region
      %s32 = ssub.s32 8192, 8192
      %33 = vsyncadd [#allocation8], %s32
      %s34 = sshll.u32 [#allocation7], 4
      %s35 = int_to_ptr.vmem [resolvable:$true] %s34
      %40 = dma.hbm_to_vmem [thread:$0]  %s2, 8192, %s35, [#allocation8], 512, 512, 32
    $region13: #{tpu_custom_call.1} parent=1 // pred_fallthru
      _
    // Predicated region
    $region14: #{tpu_custom_call.1} parent=1 // pred_check
      _
    $region15: #{tpu_custom_call.1} parent=1 // pred_check_branch
      %42 = sbr.rel (0) target = $region17
    $region16: #{tpu_custom_call.1} parent=1 // pred_region
      %43 = dma.done [#allocation5], 4096
    $region17: #{tpu_custom_call.1} parent=1 // pred_fallthru
      _
    // Predicated region
    $region18: #{tpu_custom_call.1} parent=1 // pred_check
      _
    $region19: #{tpu_custom_call.1} parent=1 // pred_check_branch
      %45 = sbr.rel (0) target = $region21
    $region20: #{tpu_custom_call.1} parent=1 // pred_region
      %46 = dma.done [#allocation8], 8192
    $region21: #{tpu_custom_call.1} parent=1 // pred_fallthru
      _
    %p47 = scmp.eq.s32.totalorder 0, 0
    // Predicated region
    $region22: #{tpu_custom_call.1} parent=1 // pred_check
      %p48 = pneg %p47
    $region23: #{tpu_custom_call.1} parent=1 // pred_check_branch
      %50 = sbr.rel (%p48) target = $region25
    $region24: #{tpu_custom_call.1} parent=1 // pred_region
      %51 = vst [vmem:[#allocation2] sm:$0xff] 0.0
      %52 = vst [vmem:[#allocation3] sm:$0xff] 0.0
    $region25: #{tpu_custom_call.1} parent=1 // pred_fallthru
      _
    %v53 = vld [vmem:[%s0] sm:$0xff]
    %v54 = vld [vmem:[#allocation7] sm:$0xff]
    %v55 = vld [vmem:[#allocation7 + $0x8] sm:$0xff]
    %v56 = vld [vmem:[#allocation7 + $0x10] sm:$0xff]
    %v57 = vld [vmem:[#allocation7 + $0x18] sm:$0xff]
    %v58 = vld [vmem:[#allocation7 + $0x20] sm:$0xff]
    %v59 = vld [vmem:[#allocation7 + $0x28] sm:$0xff]
    %v60 = vld [vmem:[#allocation7 + $0x30] sm:$0xff]
    %v61 = vld [vmem:[#allocation7 + $0x38] sm:$0xff]
    %v62 = vld [vmem:[#allocation7 + $0x40] sm:$0xff]
    %v63 = vld [vmem:[#allocation7 + $0x48] sm:$0xff]
    %v64 = vld [vmem:[#allocation7 + $0x50] sm:$0xff]
    %v65 = vld [vmem:[#allocation7 + $0x58] sm:$0xff]
    %v66 = vld [vmem:[#allocation7 + $0x60] sm:$0xff]
    %v67 = vld [vmem:[#allocation7 + $0x68] sm:$0xff]
    %v68 = vld [vmem:[#allocation7 + $0x70] sm:$0xff]
    %v69 = vld [vmem:[#allocation7 + $0x78] sm:$0xff]
    %v70 = vld [vmem:[#allocation7 + $0x80] sm:$0xff]
    %v71 = vld [vmem:[#allocation7 + $0x88] sm:$0xff]
    %v72 = vld [vmem:[#allocation7 + $0x90] sm:$0xff]
    %v73 = vld [vmem:[#allocation7 + $0x98] sm:$0xff]
    %v74 = vld [vmem:[#allocation7 + $0xa0] sm:$0xff]
    %v75 = vld [vmem:[#allocation7 + $0xa8] sm:$0xff]
    %v76 = vld [vmem:[#allocation7 + $0xb0] sm:$0xff]
    %v77 = vld [vmem:[#allocation7 + $0xb8] sm:$0xff]
    %v78 = vld [vmem:[#allocation7 + $0xc0] sm:$0xff]
    %v79 = vld [vmem:[#allocation7 + $0xc8] sm:$0xff]
    %v80 = vld [vmem:[#allocation7 + $0xd0] sm:$0xff]
    %v81 = vld [vmem:[#allocation7 + $0xd8] sm:$0xff]
    %v82 = vld [vmem:[#allocation7 + $0xe0] sm:$0xff]
    %v83 = vld [vmem:[#allocation7 + $0xe8] sm:$0xff]
    %v84 = vld [vmem:[#allocation7 + $0xf0] sm:$0xff]
    %v85 = vld [vmem:[#allocation7 + $0xf8] sm:$0xff]
    %v86 = vld [vmem:[#allocation7 + $0x100] sm:$0xff]
    %v87 = vld [vmem:[#allocation7 + $0x108] sm:$0xff]
    %v88 = vld [vmem:[#allocation7 + $0x110] sm:$0xff]
    %v89 = vld [vmem:[#allocation7 + $0x118] sm:$0xff]
    %v90 = vld [vmem:[#allocation7 + $0x120] sm:$0xff]
    %v91 = vld [vmem:[#allocation7 + $0x128] sm:$0xff]
    %v92 = vld [vmem:[#allocation7 + $0x130] sm:$0xff]
    %v93 = vld [vmem:[#allocation7 + $0x138] sm:$0xff]
    %v94 = vld [vmem:[#allocation7 + $0x140] sm:$0xff]
    %v95 = vld [vmem:[#allocation7 + $0x148] sm:$0xff]
    %v96 = vld [vmem:[#allocation7 + $0x150] sm:$0xff]
    %v97 = vld [vmem:[#allocation7 + $0x158] sm:$0xff]
    %v98 = vld [vmem:[#allocation7 + $0x160] sm:$0xff]
    %v99 = vld [vmem:[#allocation7 + $0x168] sm:$0xff]
    %v100 = vld [vmem:[#allocation7 + $0x170] sm:$0xff]
    %v101 = vld [vmem:[#allocation7 + $0x178] sm:$0xff]
    %v102 = vld [vmem:[#allocation7 + $0x180] sm:$0xff]
    %v103 = vld [vmem:[#allocation7 + $0x188] sm:$0xff]
    %v104 = vld [vmem:[#allocation7 + $0x190] sm:$0xff]
    %v105 = vld [vmem:[#allocation7 + $0x198] sm:$0xff]
    %v106 = vld [vmem:[#allocation7 + $0x1a0] sm:$0xff]
    %v107 = vld [vmem:[#allocation7 + $0x1a8] sm:$0xff]
    %v108 = vld [vmem:[#allocation7 + $0x1b0] sm:$0xff]
    %v109 = vld [vmem:[#allocation7 + $0x1b8] sm:$0xff]
    %v110 = vld [vmem:[#allocation7 + $0x1c0] sm:$0xff]
    %v111 = vld [vmem:[#allocation7 + $0x1c8] sm:$0xff]
    %v112 = vld [vmem:[#allocation7 + $0x1d0] sm:$0xff]
    %v113 = vld [vmem:[#allocation7 + $0x1d8] sm:$0xff]
    %v114 = vld [vmem:[#allocation7 + $0x1e0] sm:$0xff]
    %v115 = vld [vmem:[#allocation7 + $0x1e8] sm:$0xff]
    %v116 = vld [vmem:[#allocation7 + $0x1f0] sm:$0xff]
    %v117 = vld [vmem:[#allocation7 + $0x1f8] sm:$0xff]
    %s118 = smul.u32 0, 8
    %v119 = vld [vmem:[#allocation2] sm:$0xff]
    %v120 = vld [vmem:[#allocation3] sm:$0xff]
    %v121 = vld [vmem:[#allocation4] sm:$0xff]
    %v122 = vld [vmem:[#allocation4 + $0x8] sm:$0xff]
    %v123 = vld [vmem:[#allocation4 + $0x10] sm:$0xff]
    %v124 = vld [vmem:[#allocation4 + $0x18] sm:$0xff]
    %125 = vmatprep.subr.mxu0 %v115
    %126 = vmatpush1.msra.mxu0 %v114
    %127 = vmatprep.subr.mxu0 %v111
    %128 = vmatpush1.msra.mxu0 %v110
    %129 = vmatprep.subr.mxu0 %v107
    %130 = vmatpush1.msra.mxu0 %v106
    %131 = vmatprep.subr.mxu0 %v103
    %132 = vmatpush1.msra.mxu0 %v102
    %133 = vmatprep.subr.mxu0 %v99
    %134 = vmatpush1.msra.mxu0 %v98
    %135 = vmatprep.subr.mxu0 %v95
    %136 = vmatpush1.msra.mxu0 %v94
    %137 = vmatprep.subr.mxu0 %v91
    %138 = vmatpush1.msra.mxu0 %v90
    %139 = vmatprep.subr.mxu0 %v87
    %140 = vmatpush1.msra.mxu0 %v86
    %141 = vmatprep.subr.mxu0 %v83
    %142 = vmatpush1.msra.mxu0 %v82
    %143 = vmatprep.subr.mxu0 %v79
    %144 = vmatpush1.msra.mxu0 %v78
    %145 = vmatprep.subr.mxu0 %v75
    %146 = vmatpush1.msra.mxu0 %v74
    %147 = vmatprep.subr.mxu0 %v71
    %148 = vmatpush1.msra.mxu0 %v70
    %149 = vmatprep.subr.mxu0 %v67
    %150 = vmatpush1.msra.mxu0 %v66
    %151 = vmatprep.subr.mxu0 %v63
    %152 = vmatpush1.msra.mxu0 %v62
    %153 = vmatprep.subr.mxu0 %v59
    %154 = vmatpush1.msra.mxu0 %v58
    %155 = vmatprep.subr.mxu0 %v55
    %156 = vmatpush1.msra.mxu0 %v54
    %157 = vmatprep.subr.mxu0 0.0
    %158 = vmatpush2.msra.mxu0 0.0
    %159 = vmatprep.subr.mxu0 0.0
    %160 = vmatpush2.msra.mxu0 0.0
    %161 = vmatprep.subr.mxu0 0.0
    %162 = vmatpush2.msra.mxu0 0.0
    %163 = vmatprep.subr.mxu0 0.0
    %164 = vmatpush2.msra.mxu0 0.0
    %165 = vmatprep.subr.mxu0 0.0
    %166 = vmatpush2.msra.mxu0 0.0
    %167 = vmatprep.subr.mxu0 0.0
    %168 = vmatpush2.msra.mxu0 0.0
    %169 = vmatprep.subr.mxu0 0.0
    %170 = vmatpush2.msra.mxu0 0.0
    %171 = vmatprep.subr.mxu0 0.0
    %172 = vmatpush2.msra.mxu0 0.0
    %173 = vmatprep.subr.mxu0 0.0
    %174 = vmatpush2.msra.mxu0 0.0
    %175 = vmatprep.subr.mxu0 0.0
    %176 = vmatpush2.msra.mxu0 0.0
    %177 = vmatprep.subr.mxu0 0.0
    %178 = vmatpush2.msra.mxu0 0.0
    %179 = vmatprep.subr.mxu0 0.0
    %180 = vmatpush2.msra.mxu0 0.0
    %181 = vmatprep.subr.mxu0 0.0
    %182 = vmatpush2.msra.mxu0 0.0
    %183 = vmatprep.subr.mxu0 0.0
    %184 = vmatpush2.msra.mxu0 0.0
    %185 = vmatprep.subr.mxu0 0.0
    %186 = vmatpush2.msra.mxu0 0.0
    %187 = vmatprep.subr.mxu0 0.0
    %188 = vmatpush2.msra.mxu0 0.0
    %189 = vmatprep.mubr.f32.mxu0 0.0
    %190 = vmatmul.mubr.f32.gmra.mxu0 %v119
    %v191 = vpop.f32.mrf.mxu0
    %v192 = vadd.f32 0.0, %v191
    %v193 = vpop.f32.mrf.mxu0
    %v194 = vadd.f32 0.0, %v193
    %195 = vdwg.mxu0
    %196 = vmatprep.subr.mxu0 %v117
    %197 = vmatpush1.msra.mxu0 %v116
    %198 = vmatprep.subr.mxu0 %v113
    %199 = vmatpush1.msra.mxu0 %v112
    %200 = vmatprep.subr.mxu0 %v109
    %201 = vmatpush1.msra.mxu0 %v108
    %202 = vmatprep.subr.mxu0 %v105
    %203 = vmatpush1.msra.mxu0 %v104
    %204 = vmatprep.subr.mxu0 %v101
    %205 = vmatpush1.msra.mxu0 %v100
    %206 = vmatprep.subr.mxu0 %v97
    %207 = vmatpush1.msra.mxu0 %v96
    %208 = vmatprep.subr.mxu0 %v93
    %209 = vmatpush1.msra.mxu0 %v92
    %210 = vmatprep.subr.mxu0 %v89
    %211 = vmatpush1.msra.mxu0 %v88
    %212 = vmatprep.subr.mxu0 %v85
    %213 = vmatpush1.msra.mxu0 %v84
    %214 = vmatprep.subr.mxu0 %v81
    %215 = vmatpush1.msra.mxu0 %v80
    %216 = vmatprep.subr.mxu0 %v77
    %217 = vmatpush1.msra.mxu0 %v76
    %218 = vmatprep.subr.mxu0 %v73
    %219 = vmatpush1.msra.mxu0 %v72
    %220 = vmatprep.subr.mxu0 %v69
    %221 = vmatpush1.msra.mxu0 %v68
    %222 = vmatprep.subr.mxu0 %v65
    %223 = vmatpush1.msra.mxu0 %v64
    %224 = vmatprep.subr.mxu0 %v61
    %225 = vmatpush1.msra.mxu0 %v60
    %226 = vmatprep.subr.mxu0 %v57
    %227 = vmatpush1.msra.mxu0 %v56
    %228 = vmatprep.subr.mxu0 0.0
    %229 = vmatpush2.msra.mxu0 0.0
    %230 = vmatprep.subr.mxu0 0.0
    %231 = vmatpush2.msra.mxu0 0.0
    %232 = vmatprep.subr.mxu0 0.0
    %233 = vmatpush2.msra.mxu0 0.0
    %234 = vmatprep.subr.mxu0 0.0
    %235 = vmatpush2.msra.mxu0 0.0
    %236 = vmatprep.subr.mxu0 0.0
    %237 = vmatpush2.msra.mxu0 0.0
    %238 = vmatprep.subr.mxu0 0.0
    %239 = vmatpush2.msra.mxu0 0.0
    %240 = vmatprep.subr.mxu0 0.0
    %241 = vmatpush2.msra.mxu0 0.0
    %242 = vmatprep.subr.mxu0 0.0
    %243 = vmatpush2.msra.mxu0 0.0
    %244 = vmatprep.subr.mxu0 0.0
    %245 = vmatpush2.msra.mxu0 0.0
    %246 = vmatprep.subr.mxu0 0.0
    %247 = vmatpush2.msra.mxu0 0.0
    %248 = vmatprep.subr.mxu0 0.0
    %249 = vmatpush2.msra.mxu0 0.0
    %250 = vmatprep.subr.mxu0 0.0
    %251 = vmatpush2.msra.mxu0 0.0
    %252 = vmatprep.subr.mxu0 0.0
    %253 = vmatpush2.msra.mxu0 0.0
    %254 = vmatprep.subr.mxu0 0.0
    %255 = vmatpush2.msra.mxu0 0.0
    %256 = vmatprep.subr.mxu0 0.0
    %257 = vmatpush2.msra.mxu0 0.0
    %258 = vmatprep.subr.mxu0 0.0
    %259 = vmatpush2.msra.mxu0 0.0
    %260 = vmatprep.mubr.f32.mxu0 0.0
    %261 = vmatmul.mubr.f32.gmra.mxu0 %v119
    %v262 = vpop.f32.mrf.mxu0
    %v263 = vadd.f32 0.0, %v262
    %v264 = vpop.f32.mrf.mxu0
    %v265 = vadd.f32 0.0, %v264
    %266 = vdwg.mxu0
    %v267 = vadd.f32 %v121, %v192
    %v268 = vadd.f32 %v122, %v194
    %v269 = vadd.f32 %v123, %v263
    %v270 = vadd.f32 %v124, %v265
    %v271 = vxor.u32 %v267, 2147483648
    %v272 = vmul.f32 %v271, 1.442695
    %v273 = vpow.pop %v272
    %v274 = vadd.f32 %v273, 1.0
    %v275 = vrcp.pop %v274
    %v276 = vmul.f32 1.0, %v275
    %v277 = vxor.u32 %v268, 2147483648
    %v278 = vmul.f32 %v277, 1.442695
    %v279 = vpow.pop %v278
    %v280 = vadd.f32 %v279, 1.0
    %v281 = vrcp.pop %v280
    %v282 = vmul.f32 1.0, %v281
    %v283 = vtanh.pop %v269
    %v284 = vxor.u32 %v270, 2147483648
    %v285 = vmul.f32 %v284, 1.442695
    %v286 = vpow.pop %v285
    %v287 = vadd.f32 %v286, 1.0
    %v288 = vrcp.pop %v287
    %v289 = vmul.f32 1.0, %v288
    %v290 = vmul.f32 %v282, %v120
    %v291 = vmul.f32 %v276, %v283
    %v292 = vadd.f32 %v290, %v291
    %v293 = vtanh.pop %v292
    %v294 = vmul.f32 %v289, %v293
    %v295 = vstv %s118
    %vm296 = vcmp.gt.s32.totalorder %v53, %v295
    %v297 = vsel %vm296, 1, 0
    %298 = vset.pattern.permute.xlu0 0
    %299 = vperm.xlu0 %298, %v297
    %v300 = vpop.permute.xlu0 %299
    %vm301 = vcmp.eq.s32.totalorder %v300, 1
    %v302 = vsel %vm301, %v294, %v119
    %v303 = vsel %vm301, %v292, %v120
    %v304 = vsel %vm301, %v294, 0.0
    %305 = vst [vmem:[#allocation9] sm:$0xff] %v304
    %s306 = scalar_lea.vmem [#allocation4], 32
    %v307 = vld [vmem:[%s306] sm:$0xff]
    %v308 = vld [vmem:[%s306 + $0x8] sm:$0xff]
    %v309 = vld [vmem:[%s306 + $0x10] sm:$0xff]
    %v310 = vld [vmem:[%s306 + $0x18] sm:$0xff]
    %311 = vmatprep.subr.mxu0 %v115
    %312 = vmatpush1.msra.mxu0 %v114
    %313 = vmatprep.subr.mxu0 %v111
    %314 = vmatpush1.msra.mxu0 %v110
    %315 = vmatprep.subr.mxu0 %v107
    %316 = vmatpush1.msra.mxu0 %v106
    %317 = vmatprep.subr.mxu0 %v103
    %318 = vmatpush1.msra.mxu0 %v102
    %319 = vmatprep.subr.mxu0 %v99
    %320 = vmatpush1.msra.mxu0 %v98
    %321 = vmatprep.subr.mxu0 %v95
    %322 = vmatpush1.msra.mxu0 %v94
    %323 = vmatprep.subr.mxu0 %v91
    %324 = vmatpush1.msra.mxu0 %v90
    %325 = vmatprep.subr.mxu0 %v87
    %326 = vmatpush1.msra.mxu0 %v86
    %327 = vmatprep.subr.mxu0 %v83
    %328 = vmatpush1.msra.mxu0 %v82
    %329 = vmatprep.subr.mxu0 %v79
    %330 = vmatpush1.msra.mxu0 %v78
    %331 = vmatprep.subr.mxu0 %v75
    %332 = vmatpush1.msra.mxu0 %v74
    %333 = vmatprep.subr.mxu0 %v71
    %334 = vmatpush1.msra.mxu0 %v70
    %335 = vmatprep.subr.mxu0 %v67
    %336 = vmatpush1.msra.mxu0 %v66
    %337 = vmatprep.subr.mxu0 %v63
    %338 = vmatpush1.msra.mxu0 %v62
    %339 = vmatprep.subr.mxu0 %v59
    %340 = vmatpush1.msra.mxu0 %v58
    %341 = vmatprep.subr.mxu0 %v55
    %342 = vmatpush1.msra.mxu0 %v54
    %343 = vmatprep.subr.mxu0 0.0
    %344 = vmatpush2.msra.mxu0 0.0
    %345 = vmatprep.subr.mxu0 0.0
    %346 = vmatpush2.msra.mxu0 0.0
    %347 = vmatprep.subr.mxu0 0.0
    %348 = vmatpush2.msra.mxu0 0.0
    %349 = vmatprep.subr.mxu0 0.0
    %350 = vmatpush2.msra.mxu0 0.0
    %351 = vmatprep.subr.mxu0 0.0
    %352 = vmatpush2.msra.mxu0 0.0
    %353 = vmatprep.subr.mxu0 0.0
    %354 = vmatpush2.msra.mxu0 0.0
    %355 = vmatprep.subr.mxu0 0.0
    %356 = vmatpush2.msra.mxu0 0.0
    %357 = vmatprep.subr.mxu0 0.0
    %358 = vmatpush2.msra.mxu0 0.0
    %359 = vmatprep.subr.mxu0 0.0
    %360 = vmatpush2.msra.mxu0 0.0
    %361 = vmatprep.subr.mxu0 0.0
    %362 = vmatpush2.msra.mxu0 0.0
    %363 = vmatprep.subr.mxu0 0.0
    %364 = vmatpush2.msra.mxu0 0.0
    %365 = vmatprep.subr.mxu0 0.0
    %366 = vmatpush2.msra.mxu0 0.0
    %367 = vmatprep.subr.mxu0 0.0
    %368 = vmatpush2.msra.mxu0 0.0
    %369 = vmatprep.subr.mxu0 0.0
    %370 = vmatpush2.msra.mxu0 0.0
    %371 = vmatprep.subr.mxu0 0.0
    %372 = vmatpush2.msra.mxu0 0.0
    %373 = vmatprep.subr.mxu0 0.0
    %374 = vmatpush2.msra.mxu0 0.0
    %375 = vmatprep.mubr.f32.mxu0 0.0
    %376 = vmatmul.mubr.f32.gmra.mxu0 %v302
    %v377 = vpop.f32.mrf.mxu0
    %v378 = vadd.f32 0.0, %v377
    %v379 = vpop.f32.mrf.mxu0
    %v380 = vadd.f32 0.0, %v379
    %381 = vdwg.mxu0
    %382 = vmatprep.subr.mxu0 %v117
    %383 = vmatpush1.msra.mxu0 %v116
    %384 = vmatprep.subr.mxu0 %v113
    %385 = vmatpush1.msra.mxu0 %v112
    %386 = vmatprep.subr.mxu0 %v109
    %387 = vmatpush1.msra.mxu0 %v108
    %388 = vmatprep.subr.mxu0 %v105
    %389 = vmatpush1.msra.mxu0 %v104
    %390 = vmatprep.subr.mxu0 %v101
    %391 = vmatpush1.msra.mxu0 %v100
    %392 = vmatprep.subr.mxu0 %v97
    %393 = vmatpush1.msra.mxu0 %v96
    %394 = vmatprep.subr.mxu0 %v93
    %395 = vmatpush1.msra.mxu0 %v92
    %396 = vmatprep.subr.mxu0 %v89
    %397 = vmatpush1.msra.mxu0 %v88
    %398 = vmatprep.subr.mxu0 %v85
    %399 = vmatpush1.msra.mxu0 %v84
    %400 = vmatprep.subr.mxu0 %v81
    %401 = vmatpush1.msra.mxu0 %v80
    %402 = vmatprep.subr.mxu0 %v77
    %403 = vmatpush1.msra.mxu0 %v76
    %404 = vmatprep.subr.mxu0 %v73
    %405 = vmatpush1.msra.mxu0 %v72
    %406 = vmatprep.subr.mxu0 %v69
    %407 = vmatpush1.msra.mxu0 %v68
    %408 = vmatprep.subr.mxu0 %v65
    %409 = vmatpush1.msra.mxu0 %v64
    %410 = vmatprep.subr.mxu0 %v61
    %411 = vmatpush1.msra.mxu0 %v60
    %412 = vmatprep.subr.mxu0 %v57
    %413 = vmatpush1.msra.mxu0 %v56
    %414 = vmatprep.subr.mxu0 0.0
    %415 = vmatpush2.msra.mxu0 0.0
    %416 = vmatprep.subr.mxu0 0.0
    %417 = vmatpush2.msra.mxu0 0.0
    %418 = vmatprep.subr.mxu0 0.0
    %419 = vmatpush2.msra.mxu0 0.0
    %420 = vmatprep.subr.mxu0 0.0
    %421 = vmatpush2.msra.mxu0 0.0
    %422 = vmatprep.subr.mxu0 0.0
    %423 = vmatpush2.msra.mxu0 0.0
    %424 = vmatprep.subr.mxu0 0.0
    %425 = vmatpush2.msra.mxu0 0.0
    %426 = vmatprep.subr.mxu0 0.0
    %427 = vmatpush2.msra.mxu0 0.0
    %428 = vmatprep.subr.mxu0 0.0
    %429 = vmatpush2.msra.mxu0 0.0
    %430 = vmatprep.subr.mxu0 0.0
    %431 = vmatpush2.msra.mxu0 0.0
    %432 = vmatprep.subr.mxu0 0.0
    %433 = vmatpush2.msra.mxu0 0.0
    %434 = vmatprep.subr.mxu0 0.0
    %435 = vmatpush2.msra.mxu0 0.0
    %436 = vmatprep.subr.mxu0 0.0
    %437 = vmatpush2.msra.mxu0 0.0
    %438 = vmatprep.subr.mxu0 0.0
    %439 = vmatpush2.msra.mxu0 0.0
    %440 = vmatprep.subr.mxu0 0.0
    %441 = vmatpush2.msra.mxu0 0.0
    %442 = vmatprep.subr.mxu0 0.0
    %443 = vmatpush2.msra.mxu0 0.0
    %444 = vmatprep.subr.mxu0 0.0
    %445 = vmatpush2.msra.mxu0 0.0
    %446 = vmatprep.mubr.f32.mxu0 0.0
    %447 = vmatmul.mubr.f32.gmra.mxu0 %v302
    %v448 = vpop.f32.mrf.mxu0
    %v449 = vadd.f32 0.0, %v448
    %v450 = vpop.f32.mrf.mxu0
    %v451 = vadd.f32 0.0, %v450
    %452 = vdwg.mxu0
    %v453 = vadd.f32 %v307, %v378
    %v454 = vadd.f32 %v308, %v380
    %v455 = vadd.f32 %v309, %v449
    %v456 = vadd.f32 %v310, %v451
    %v457 = vxor.u32 %v453, 2147483648
    %v458 = vmul.f32 %v457, 1.442695
    %v459 = vpow.pop %v458
    %v460 = vadd.f32 %v459, 1.0
    %v461 = vrcp.pop %v460
    %v462 = vmul.f32 1.0, %v461
    %v463 = vxor.u32 %v454, 2147483648
    %v464 = vmul.f32 %v463, 1.442695
    %v465 = vpow.pop %v464
    %v466 = vadd.f32 %v465, 1.0
    %v467 = vrcp.pop %v466
    %v468 = vmul.f32 1.0, %v467
    %v469 = vtanh.pop %v455
    %v470 = vxor.u32 %v456, 2147483648
    %v471 = vmul.f32 %v470, 1.442695
    %v472 = vpow.pop %v471
    %v473 = vadd.f32 %v472, 1.0
    %v474 = vrcp.pop %v473
    %v475 = vmul.f32 1.0, %v474
    %v476 = vmul.f32 %v468, %v303
    %v477 = vmul.f32 %v462, %v469
    %v478 = vadd.f32 %v476, %v477
    %v479 = vtanh.pop %v478
    %v480 = vmul.f32 %v475, %v479
    %s481 = sadd.s32 %s118, 1
    %v482 = vstv %s481
    %vm483 = vcmp.gt.s32.totalorder %v53, %v482
    %v484 = vsel %vm483, 1, 0
    %485 = vset.pattern.permute.xlu0 0
    %486 = vperm.xlu0 %485, %v484
    %v487 = vpop.permute.xlu0 %486
    %vm488 = vcmp.eq.s32.totalorder %v487, 1
    %v489 = vsel %vm488, %v480, %v302
    %v490 = vsel %vm488, %v478, %v303
    %v491 = vsel %vm488, %v480, 0.0
    %s492 = scalar_lea.vmem [#allocation9], 8
    %493 = vst [vmem:[%s492] sm:$0xff] %v491
    %s494 = scalar_lea.vmem [#allocation4], 64
    %v495 = vld [vmem:[%s494] sm:$0xff]
    %v496 = vld [vmem:[%s494 + $0x8] sm:$0xff]
    %v497 = vld [vmem:[%s494 + $0x10] sm:$0xff]
    %v498 = vld [vmem:[%s494 + $0x18] sm:$0xff]
    %499 = vmatprep.subr.mxu0 %v115
    %500 = vmatpush1.msra.mxu0 %v114
    %501 = vmatprep.subr.mxu0 %v111
    %502 = vmatpush1.msra.mxu0 %v110
    %503 = vmatprep.subr.mxu0 %v107
    %504 = vmatpush1.msra.mxu0 %v106
    %505 = vmatprep.subr.mxu0 %v103
    %506 = vmatpush1.msra.mxu0 %v102
    %507 = vmatprep.subr.mxu0 %v99
    %508 = vmatpush1.msra.mxu0 %v98
    %509 = vmatprep.subr.mxu0 %v95
    %510 = vmatpush1.msra.mxu0 %v94
    %511 = vmatprep.subr.mxu0 %v91
    %512 = vmatpush1.msra.mxu0 %v90
    %513 = vmatprep.subr.mxu0 %v87
    %514 = vmatpush1.msra.mxu0 %v86
    %515 = vmatprep.subr.mxu0 %v83
    %516 = vmatpush1.msra.mxu0 %v82
    %517 = vmatprep.subr.mxu0 %v79
    %518 = vmatpush1.msra.mxu0 %v78
    %519 = vmatprep.subr.mxu0 %v75
    %520 = vmatpush1.msra.mxu0 %v74
    %521 = vmatprep.subr.mxu0 %v71
    %522 = vmatpush1.msra.mxu0 %v70
    %523 = vmatprep.subr.mxu0 %v67
    %524 = vmatpush1.msra.mxu0 %v66
    %525 = vmatprep.subr.mxu0 %v63
    %526 = vmatpush1.msra.mxu0 %v62
    %527 = vmatprep.subr.mxu0 %v59
    %528 = vmatpush1.msra.mxu0 %v58
    %529 = vmatprep.subr.mxu0 %v55
    %530 = vmatpush1.msra.mxu0 %v54
    %531 = vmatprep.subr.mxu0 0.0
    %532 = vmatpush2.msra.mxu0 0.0
    %533 = vmatprep.subr.mxu0 0.0
    %534 = vmatpush2.msra.mxu0 0.0
    %535 = vmatprep.subr.mxu0 0.0
    %536 = vmatpush2.msra.mxu0 0.0
    %537 = vmatprep.subr.mxu0 0.0
    %538 = vmatpush2.msra.mxu0 0.0
    %539 = vmatprep.subr.mxu0 0.0
    %540 = vmatpush2.msra.mxu0 0.0
    %541 = vmatprep.subr.mxu0 0.0
    %542 = vmatpush2.msra.mxu0 0.0
    %543 = vmatprep.subr.mxu0 0.0
    %544 = vmatpush2.msra.mxu0 0.0
    %545 = vmatprep.subr.mxu0 0.0
    %546 = vmatpush2.msra.mxu0 0.0
    %547 = vmatprep.subr.mxu0 0.0
    %548 = vmatpush2.msra.mxu0 0.0
    %549 = vmatprep.subr.mxu0 0.0
    %550 = vmatpush2.msra.mxu0 0.0
    %551 = vmatprep.subr.mxu0 0.0
    %552 = vmatpush2.msra.mxu0 0.0
    %553 = vmatprep.subr.mxu0 0.0
    %554 = vmatpush2.msra.mxu0 0.0
    %555 = vmatprep.subr.mxu0 0.0
    %556 = vmatpush2.msra.mxu0 0.0
    %557 = vmatprep.subr.mxu0 0.0
    %558 = vmatpush2.msra.mxu0 0.0
    %559 = vmatprep.subr.mxu0 0.0
    %560 = vmatpush2.msra.mxu0 0.0
    %561 = vmatprep.subr.mxu0 0.0
    %562 = vmatpush2.msra.mxu0 0.0
    %563 = vmatprep.mubr.f32.mxu0 0.0
    %564 = vmatmul.mubr.f32.gmra.mxu0 %v489
    %v565 = vpop.f32.mrf.mxu0
    %v566 = vadd.f32 0.0, %v565
    %v567 = vpop.f32.mrf.mxu0
    %v568 = vadd.f32 0.0, %v567
    %569 = vdwg.mxu0
    %570 = vmatprep.subr.mxu0 %v117
    %571 = vmatpush1.msra.mxu0 %v116
    %572 = vmatprep.subr.mxu0 %v113
    %573 = vmatpush1.msra.mxu0 %v112
    %574 = vmatprep.subr.mxu0 %v109
    %575 = vmatpush1.msra.mxu0 %v108
    %576 = vmatprep.subr.mxu0 %v105
    %577 = vmatpush1.msra.mxu0 %v104
    %578 = vmatprep.subr.mxu0 %v101
    %579 = vmatpush1.msra.mxu0 %v100
    %580 = vmatprep.subr.mxu0 %v97
    %581 = vmatpush1.msra.mxu0 %v96
    %582 = vmatprep.subr.mxu0 %v93
    %583 = vmatpush1.msra.mxu0 %v92
    %584 = vmatprep.subr.mxu0 %v89
    %585 = vmatpush1.msra.mxu0 %v88
    %586 = vmatprep.subr.mxu0 %v85
    %587 = vmatpush1.msra.mxu0 %v84
    %588 = vmatprep.subr.mxu0 %v81
    %589 = vmatpush1.msra.mxu0 %v80
    %590 = vmatprep.subr.mxu0 %v77
    %591 = vmatpush1.msra.mxu0 %v76
    %592 = vmatprep.subr.mxu0 %v73
    %593 = vmatpush1.msra.mxu0 %v72
    %594 = vmatprep.subr.mxu0 %v69
    %595 = vmatpush1.msra.mxu0 %v68
    %596 = vmatprep.subr.mxu0 %v65
    %597 = vmatpush1.msra.mxu0 %v64
    %598 = vmatprep.subr.mxu0 %v61
    %599 = vmatpush1.msra.mxu0 %v60
    %600 = vmatprep.subr.mxu0 %v57
    %601 = vmatpush1.msra.mxu0 %v56
    %602 = vmatprep.subr.mxu0 0.0
    %603 = vmatpush2.msra.mxu0 0.0
    %604 = vmatprep.subr.mxu0 0.0
    %605 = vmatpush2.msra.mxu0 0.0
    %606 = vmatprep.subr.mxu0 0.0
    %607 = vmatpush2.msra.mxu0 0.0
    %608 = vmatprep.subr.mxu0 0.0
    %609 = vmatpush2.msra.mxu0 0.0
    %610 = vmatprep.subr.mxu0 0.0
    %611 = vmatpush2.msra.mxu0 0.0
    %612 = vmatprep.subr.mxu0 0.0
    %613 = vmatpush2.msra.mxu0 0.0
    %614 = vmatprep.subr.mxu0 0.0
    %615 = vmatpush2.msra.mxu0 0.0
    %616 = vmatprep.subr.mxu0 0.0
    %617 = vmatpush2.msra.mxu0 0.0
    %618 = vmatprep.subr.mxu0 0.0
    %619 = vmatpush2.msra.mxu0 0.0
    %620 = vmatprep.subr.mxu0 0.0
    %621 = vmatpush2.msra.mxu0 0.0
    %622 = vmatprep.subr.mxu0 0.0
    %623 = vmatpush2.msra.mxu0 0.0
    %624 = vmatprep.subr.mxu0 0.0
    %625 = vmatpush2.msra.mxu0 0.0
    %626 = vmatprep.subr.mxu0 0.0
    %627 = vmatpush2.msra.mxu0 0.0
    %628 = vmatprep.subr.mxu0 0.0
    %629 = vmatpush2.msra.mxu0 0.0
    %630 = vmatprep.subr.mxu0 0.0
    %631 = vmatpush2.msra.mxu0 0.0
    %632 = vmatprep.subr.mxu0 0.0
    %633 = vmatpush2.msra.mxu0 0.0
    %634 = vmatprep.mubr.f32.mxu0 0.0
    %635 = vmatmul.mubr.f32.gmra.mxu0 %v489
    %v636 = vpop.f32.mrf.mxu0
    %v637 = vadd.f32 0.0, %v636
    %v638 = vpop.f32.mrf.mxu0
    %v639 = vadd.f32 0.0, %v638
    %640 = vdwg.mxu0
    %v641 = vadd.f32 %v495, %v566
    %v642 = vadd.f32 %v496, %v568
    %v643 = vadd.f32 %v497, %v637
    %v644 = vadd.f32 %v498, %v639
    %v645 = vxor.u32 %v641, 2147483648
    %v646 = vmul.f32 %v645, 1.442695
    %v647 = vpow.pop %v646
    %v648 = vadd.f32 %v647, 1.0
    %v649 = vrcp.pop %v648
    %v650 = vmul.f32 1.0, %v649
    %v651 = vxor.u32 %v642, 2147483648
    %v652 = vmul.f32 %v651, 1.442695
    %v653 = vpow.pop %v652
    %v654 = vadd.f32 %v653, 1.0
    %v655 = vrcp.pop %v654
    %v656 = vmul.f32 1.0, %v655
    %v657 = vtanh.pop %v643
    %v658 = vxor.u32 %v644, 2147483648
    %v659 = vmul.f32 %v658, 1.442695
    %v660 = vpow.pop %v659
    %v661 = vadd.f32 %v660, 1.0
    %v662 = vrcp.pop %v661
    %v663 = vmul.f32 1.0, %v662
    %v664 = vmul.f32 %v656, %v490
    %v665 = vmul.f32 %v650, %v657
    %v666 = vadd.f32 %v664, %v665
    %v667 = vtanh.pop %v666
    %v668 = vmul.f32 %v663, %v667
    %s669 = sadd.s32 %s118, 2
    %v670 = vstv %s669
    %vm671 = vcmp.gt.s32.totalorder %v53, %v670
    %v672 = vsel %vm671, 1, 0
    %673 = vset.pattern.permute.xlu0 0
    %674 = vperm.xlu0 %673, %v672
    %v675 = vpop.permute.xlu0 %674
    %vm676 = vcmp.eq.s32.totalorder %v675, 1
    %v677 = vsel %vm676, %v668, %v489
    %v678 = vsel %vm676, %v666, %v490
    %v679 = vsel %vm676, %v668, 0.0
    %s680 = scalar_lea.vmem [#allocation9], 16
    %681 = vst [vmem:[%s680] sm:$0xff] %v679
    %s682 = scalar_lea.vmem [#allocation4], 96
    %v683 = vld [vmem:[%s682] sm:$0xff]
    %v684 = vld [vmem:[%s682 + $0x8] sm:$0xff]
    %v685 = vld [vmem:[%s682 + $0x10] sm:$0xff]
    %v686 = vld [vmem:[%s682 + $0x18] sm:$0xff]
    %687 = vmatprep.subr.mxu0 %v115
    %688 = vmatpush1.msra.mxu0 %v114
    %689 = vmatprep.subr.mxu0 %v111
    %690 = vmatpush1.msra.mxu0 %v110
    %691 = vmatprep.subr.mxu0 %v107
    %692 = vmatpush1.msra.mxu0 %v106
    %693 = vmatprep.subr.mxu0 %v103
    %694 = vmatpush1.msra.mxu0 %v102
    %695 = vmatprep.subr.mxu0 %v99
    %696 = vmatpush1.msra.mxu0 %v98
    %697 = vmatprep.subr.mxu0 %v95
    %698 = vmatpush1.msra.mxu0 %v94
    %699 = vmatprep.subr.mxu0 %v91
    %700 = vmatpush1.msra.mxu0 %v90
    %701 = vmatprep.subr.mxu0 %v87
    %702 = vmatpush1.msra.mxu0 %v86
    %703 = vmatprep.subr.mxu0 %v83
    %704 = vmatpush1.msra.mxu0 %v82
    %705 = vmatprep.subr.mxu0 %v79
    %706 = vmatpush1.msra.mxu0 %v78
    %707 = vmatprep.subr.mxu0 %v75
    %708 = vmatpush1.msra.mxu0 %v74
    %709 = vmatprep.subr.mxu0 %v71
    %710 = vmatpush1.msra.mxu0 %v70
    %711 = vmatprep.subr.mxu0 %v67
    %712 = vmatpush1.msra.mxu0 %v66
    %713 = vmatprep.subr.mxu0 %v63
    %714 = vmatpush1.msra.mxu0 %v62
    %715 = vmatprep.subr.mxu0 %v59
    %716 = vmatpush1.msra.mxu0 %v58
    %717 = vmatprep.subr.mxu0 %v55
    %718 = vmatpush1.msra.mxu0 %v54
    %719 = vmatprep.subr.mxu0 0.0
    %720 = vmatpush2.msra.mxu0 0.0
    %721 = vmatprep.subr.mxu0 0.0
    %722 = vmatpush2.msra.mxu0 0.0
    %723 = vmatprep.subr.mxu0 0.0
    %724 = vmatpush2.msra.mxu0 0.0
    %725 = vmatprep.subr.mxu0 0.0
    %726 = vmatpush2.msra.mxu0 0.0
    %727 = vmatprep.subr.mxu0 0.0
    %728 = vmatpush2.msra.mxu0 0.0
    %729 = vmatprep.subr.mxu0 0.0
    %730 = vmatpush2.msra.mxu0 0.0
    %731 = vmatprep.subr.mxu0 0.0
    %732 = vmatpush2.msra.mxu0 0.0
    %733 = vmatprep.subr.mxu0 0.0
    %734 = vmatpush2.msra.mxu0 0.0
    %735 = vmatprep.subr.mxu0 0.0
    %736 = vmatpush2.msra.mxu0 0.0
    %737 = vmatprep.subr.mxu0 0.0
    %738 = vmatpush2.msra.mxu0 0.0
    %739 = vmatprep.subr.mxu0 0.0
    %740 = vmatpush2.msra.mxu0 0.0
    %741 = vmatprep.subr.mxu0 0.0
    %742 = vmatpush2.msra.mxu0 0.0
    %743 = vmatprep.subr.mxu0 0.0
    %744 = vmatpush2.msra.mxu0 0.0
    %745 = vmatprep.subr.mxu0 0.0
    %746 = vmatpush2.msra.mxu0 0.0
    %747 = vmatprep.subr.mxu0 0.0
    %748 = vmatpush2.msra.mxu0 0.0
    %749 = vmatprep.subr.mxu0 0.0
    %750 = vmatpush2.msra.mxu0 0.0
    %751 = vmatprep.mubr.f32.mxu0 0.0
    %752 = vmatmul.mubr.f32.gmra.mxu0 %v677
    %v753 = vpop.f32.mrf.mxu0
    %v754 = vadd.f32 0.0, %v753
    %v755 = vpop.f32.mrf.mxu0
    %v756 = vadd.f32 0.0, %v755
    %757 = vdwg.mxu0
    %758 = vmatprep.subr.mxu0 %v117
    %759 = vmatpush1.msra.mxu0 %v116
    %760 = vmatprep.subr.mxu0 %v113
    %761 = vmatpush1.msra.mxu0 %v112
    %762 = vmatprep.subr.mxu0 %v109
    %763 = vmatpush1.msra.mxu0 %v108
    %764 = vmatprep.subr.mxu0 %v105
    %765 = vmatpush1.msra.mxu0 %v104
    %766 = vmatprep.subr.mxu0 %v101
    %767 = vmatpush1.msra.mxu0 %v100
    %768 = vmatprep.subr.mxu0 %v97
    %769 = vmatpush1.msra.mxu0 %v96
    %770 = vmatprep.subr.mxu0 %v93
    %771 = vmatpush1.msra.mxu0 %v92
    %772 = vmatprep.subr.mxu0 %v89
    %773 = vmatpush1.msra.mxu0 %v88
    %774 = vmatprep.subr.mxu0 %v85
    %775 = vmatpush1.msra.mxu0 %v84
    %776 = vmatprep.subr.mxu0 %v81
    %777 = vmatpush1.msra.mxu0 %v80
    %778 = vmatprep.subr.mxu0 %v77
    %779 = vmatpush1.msra.mxu0 %v76
    %780 = vmatprep.subr.mxu0 %v73
    %781 = vmatpush1.msra.mxu0 %v72
    %782 = vmatprep.subr.mxu0 %v69
    %783 = vmatpush1.msra.mxu0 %v68
    %784 = vmatprep.subr.mxu0 %v65
    %785 = vmatpush1.msra.mxu0 %v64
    %786 = vmatprep.subr.mxu0 %v61
    %787 = vmatpush1.msra.mxu0 %v60
    %788 = vmatprep.subr.mxu0 %v57
    %789 = vmatpush1.msra.mxu0 %v56
    %790 = vmatprep.subr.mxu0 0.0
    %791 = vmatpush2.msra.mxu0 0.0
    %792 = vmatprep.subr.mxu0 0.0
    %793 = vmatpush2.msra.mxu0 0.0
    %794 = vmatprep.subr.mxu0 0.0
    %795 = vmatpush2.msra.mxu0 0.0
    %796 = vmatprep.subr.mxu0 0.0
    %797 = vmatpush2.msra.mxu0 0.0
    %798 = vmatprep.subr.mxu0 0.0
    %799 = vmatpush2.msra.mxu0 0.0
    %800 = vmatprep.subr.mxu0 0.0
    %801 = vmatpush2.msra.mxu0 0.0
    %802 = vmatprep.subr.mxu0 0.0
    %803 = vmatpush2.msra.mxu0 0.0
    %804 = vmatprep.subr.mxu0 0.0
    %805 = vmatpush2.msra.mxu0 0.0
    %806 = vmatprep.subr.mxu0 0.0
    %807 = vmatpush2.msra.mxu0 0.0
    %808 = vmatprep.subr.mxu0 0.0
    %809 = vmatpush2.msra.mxu0 0.0
    %810 = vmatprep.subr.mxu0 0.0
    %811 = vmatpush2.msra.mxu0 0.0
    %812 = vmatprep.subr.mxu0 0.0
    %813 = vmatpush2.msra.mxu0 0.0
    %814 = vmatprep.subr.mxu0 0.0
    %815 = vmatpush2.msra.mxu0 0.0
    %816 = vmatprep.subr.mxu0 0.0
    %817 = vmatpush2.msra.mxu0 0.0
    %818 = vmatprep.subr.mxu0 0.0
    %819 = vmatpush2.msra.mxu0 0.0
    %820 = vmatprep.subr.mxu0 0.0
    %821 = vmatpush2.msra.mxu0 0.0
    %822 = vmatprep.mubr.f32.mxu0 0.0
    %823 = vmatmul.mubr.f32.gmra.mxu0 %v677
    %v824 = vpop.f32.mrf.mxu0
    %v825 = vadd.f32 0.0, %v824
    %v826 = vpop.f32.mrf.mxu0
    %v827 = vadd.f32 0.0, %v826
    %828 = vdwg.mxu0
    %v829 = vadd.f32 %v683, %v754
    %v830 = vadd.f32 %v684, %v756
    %v831 = vadd.f32 %v685, %v825
    %v832 = vadd.f32 %v686, %v827
    %v833 = vxor.u32 %v829, 2147483648
    %v834 = vmul.f32 %v833, 1.442695
    %v835 = vpow.pop %v834
    %v836 = vadd.f32 %v835, 1.0
    %v837 = vrcp.pop %v836
    %v838 = vmul.f32 1.0, %v837
    %v839 = vxor.u32 %v830, 2147483648
    %v840 = vmul.f32 %v839, 1.442695
    %v841 = vpow.pop %v840
    %v842 = vadd.f32 %v841, 1.0
    %v843 = vrcp.pop %v842
    %v844 = vmul.f32 1.0, %v843
    %v845 = vtanh.pop %v831
    %v846 = vxor.u32 %v832, 2147483648
    %v847 = vmul.f32 %v846, 1.442695
    %v848 = vpow.pop %v847
    %v849 = vadd.f32 %v848, 1.0
    %v850 = vrcp.pop %v849
    %v851 = vmul.f32 1.0, %v850
    %v852 = vmul.f32 %v844, %v678
    %v853 = vmul.f32 %v838, %v845
    %v854 = vadd.f32 %v852, %v853
    %v855 = vtanh.pop %v854
    %v856 = vmul.f32 %v851, %v855
    %s857 = sadd.s32 %s118, 3
    %v858 = vstv %s857
    %vm859 = vcmp.gt.s32.totalorder %v53, %v858
    %v860 = vsel %vm859, 1, 0
    %861 = vset.pattern.permute.xlu0 0
    %862 = vperm.xlu0 %861, %v860
    %v863 = vpop.permute.xlu0 %862
    %vm864 = vcmp.eq.s32.totalorder %v863, 1
    %v865 = vsel %vm864, %v856, %v677
    %v866 = vsel %vm864, %v854, %v678
    %v867 = vsel %vm864, %v856, 0.0
    %s868 = scalar_lea.vmem [#allocation9], 24
    %869 = vst [vmem:[%s868] sm:$0xff] %v867
    %s870 = scalar_lea.vmem [#allocation4], 128
    %v871 = vld [vmem:[%s870] sm:$0xff]
    %v872 = vld [vmem:[%s870 + $0x8] sm:$0xff]
    %v873 = vld [vmem:[%s870 + $0x10] sm:$0xff]
    %v874 = vld [vmem:[%s870 + $0x18] sm:$0xff]
    %875 = vmatprep.subr.mxu0 %v115
    %876 = vmatpush1.msra.mxu0 %v114
    %877 = vmatprep.subr.mxu0 %v111
    %878 = vmatpush1.msra.mxu0 %v110
    %879 = vmatprep.subr.mxu0 %v107
    %880 = vmatpush1.msra.mxu0 %v106
    %881 = vmatprep.subr.mxu0 %v103
    %882 = vmatpush1.msra.mxu0 %v102
    %883 = vmatprep.subr.mxu0 %v99
    %884 = vmatpush1.msra.mxu0 %v98
    %885 = vmatprep.subr.mxu0 %v95
    %886 = vmatpush1.msra.mxu0 %v94
    %887 = vmatprep.subr.mxu0 %v91
    %888 = vmatpush1.msra.mxu0 %v90
    %889 = vmatprep.subr.mxu0 %v87
    %890 = vmatpush1.msra.mxu0 %v86
    %891 = vmatprep.subr.mxu0 %v83
    %892 = vmatpush1.msra.mxu0 %v82
    %893 = vmatprep.subr.mxu0 %v79
    %894 = vmatpush1.msra.mxu0 %v78
    %895 = vmatprep.subr.mxu0 %v75
    %896 = vmatpush1.msra.mxu0 %v74
    %897 = vmatprep.subr.mxu0 %v71
    %898 = vmatpush1.msra.mxu0 %v70
    %899 = vmatprep.subr.mxu0 %v67
    %900 = vmatpush1.msra.mxu0 %v66
    %901 = vmatprep.subr.mxu0 %v63
    %902 = vmatpush1.msra.mxu0 %v62
    %903 = vmatprep.subr.mxu0 %v59
    %904 = vmatpush1.msra.mxu0 %v58
    %905 = vmatprep.subr.mxu0 %v55
    %906 = vmatpush1.msra.mxu0 %v54
    %907 = vmatprep.subr.mxu0 0.0
    %908 = vmatpush2.msra.mxu0 0.0
    %909 = vmatprep.subr.mxu0 0.0
    %910 = vmatpush2.msra.mxu0 0.0
    %911 = vmatprep.subr.mxu0 0.0
    %912 = vmatpush2.msra.mxu0 0.0
    %913 = vmatprep.subr.mxu0 0.0
    %914 = vmatpush2.msra.mxu0 0.0
    %915 = vmatprep.subr.mxu0 0.0
    %916 = vmatpush2.msra.mxu0 0.0
    %917 = vmatprep.subr.mxu0 0.0
    %918 = vmatpush2.msra.mxu0 0.0
    %919 = vmatprep.subr.mxu0 0.0
    %920 = vmatpush2.msra.mxu0 0.0
    %921 = vmatprep.subr.mxu0 0.0
    %922 = vmatpush2.msra.mxu0 0.0
    %923 = vmatprep.subr.mxu0 0.0
    %924 = vmatpush2.msra.mxu0 0.0
    %925 = vmatprep.subr.mxu0 0.0
    %926 = vmatpush2.msra.mxu0 0.0
    %927 = vmatprep.subr.mxu0 0.0
    %928 = vmatpush2.msra.mxu0 0.0
    %929 = vmatprep.subr.mxu0 0.0
    %930 = vmatpush2.msra.mxu0 0.0
    %931 = vmatprep.subr.mxu0 0.0
    %932 = vmatpush2.msra.mxu0 0.0
    %933 = vmatprep.subr.mxu0 0.0
    %934 = vmatpush2.msra.mxu0 0.0
    %935 = vmatprep.subr.mxu0 0.0
    %936 = vmatpush2.msra.mxu0 0.0
    %937 = vmatprep.subr.mxu0 0.0
    %938 = vmatpush2.msra.mxu0 0.0
    %939 = vmatprep.mubr.f32.mxu0 0.0
    %940 = vmatmul.mubr.f32.gmra.mxu0 %v865
    %v941 = vpop.f32.mrf.mxu0
    %v942 = vadd.f32 0.0, %v941
    %v943 = vpop.f32.mrf.mxu0
    %v944 = vadd.f32 0.0, %v943
    %945 = vdwg.mxu0
    %946 = vmatprep.subr.mxu0 %v117
    %947 = vmatpush1.msra.mxu0 %v116
    %948 = vmatprep.subr.mxu0 %v113
    %949 = vmatpush1.msra.mxu0 %v112
    %950 = vmatprep.subr.mxu0 %v109
    %951 = vmatpush1.msra.mxu0 %v108
    %952 = vmatprep.subr.mxu0 %v105
    %953 = vmatpush1.msra.mxu0 %v104
    %954 = vmatprep.subr.mxu0 %v101
    %955 = vmatpush1.msra.mxu0 %v100
    %956 = vmatprep.subr.mxu0 %v97
    %957 = vmatpush1.msra.mxu0 %v96
    %958 = vmatprep.subr.mxu0 %v93
    %959 = vmatpush1.msra.mxu0 %v92
    %960 = vmatprep.subr.mxu0 %v89
    %961 = vmatpush1.msra.mxu0 %v88
    %962 = vmatprep.subr.mxu0 %v85
    %963 = vmatpush1.msra.mxu0 %v84
    %964 = vmatprep.subr.mxu0 %v81
    %965 = vmatpush1.msra.mxu0 %v80
    %966 = vmatprep.subr.mxu0 %v77
    %967 = vmatpush1.msra.mxu0 %v76
    %968 = vmatprep.subr.mxu0 %v73
    %969 = vmatpush1.msra.mxu0 %v72
    %970 = vmatprep.subr.mxu0 %v69
    %971 = vmatpush1.msra.mxu0 %v68
    %972 = vmatprep.subr.mxu0 %v65
    %973 = vmatpush1.msra.mxu0 %v64
    %974 = vmatprep.subr.mxu0 %v61
    %975 = vmatpush1.msra.mxu0 %v60
    %976 = vmatprep.subr.mxu0 %v57
    %977 = vmatpush1.msra.mxu0 %v56
    %978 = vmatprep.subr.mxu0 0.0
    %979 = vmatpush2.msra.mxu0 0.0
    %980 = vmatprep.subr.mxu0 0.0
    %981 = vmatpush2.msra.mxu0 0.0
    %982 = vmatprep.subr.mxu0 0.0
    %983 = vmatpush2.msra.mxu0 0.0
    %984 = vmatprep.subr.mxu0 0.0
    %985 = vmatpush2.msra.mxu0 0.0
    %986 = vmatprep.subr.mxu0 0.0
    %987 = vmatpush2.msra.mxu0 0.0
    %988 = vmatprep.subr.mxu0 0.0
    %989 = vmatpush2.msra.mxu0 0.0
    %990 = vmatprep.subr.mxu0 0.0
    %991 = vmatpush2.msra.mxu0 0.0
    %992 = vmatprep.subr.mxu0 0.0
    %993 = vmatpush2.msra.mxu0 0.0
    %994 = vmatprep.subr.mxu0 0.0
    %995 = vmatpush2.msra.mxu0 0.0
    %996 = vmatprep.subr.mxu0 0.0
    %997 = vmatpush2.msra.mxu0 0.0
    %998 = vmatprep.subr.mxu0 0.0
    %999 = vmatpush2.msra.mxu0 0.0
    %1000 = vmatprep.subr.mxu0 0.0
    %1001 = vmatpush2.msra.mxu0 0.0
    %1002 = vmatprep.subr.mxu0 0.0
    %1003 = vmatpush2.msra.mxu0 0.0
    %1004 = vmatprep.subr.mxu0 0.0
    %1005 = vmatpush2.msra.mxu0 0.0
    %1006 = vmatprep.subr.mxu0 0.0
    %1007 = vmatpush2.msra.mxu0 0.0
    %1008 = vmatprep.subr.mxu0 0.0
    %1009 = vmatpush2.msra.mxu0 0.0
    %1010 = vmatprep.mubr.f32.mxu0 0.0
    %1011 = vmatmul.mubr.f32.gmra.mxu0 %v865
    %v1012 = vpop.f32.mrf.mxu0
    %v1013 = vadd.f32 0.0, %v1012
    %v1014 = vpop.f32.mrf.mxu0
    %v1015 = vadd.f32 0.0, %v1014
    %1016 = vdwg.mxu0
    %v1017 = vadd.f32 %v871, %v942
    %v1018 = vadd.f32 %v872, %v944
    %v1019 = vadd.f32 %v873, %v1013
    %v1020 = vadd.f32 %v874, %v1015
    %v1021 = vxor.u32 %v1017, 2147483648
    %v1022 = vmul.f32 %v1021, 1.442695
    %v1023 = vpow.pop %v1022
    %v1024 = vadd.f32 %v1023, 1.0
    %v1025 = vrcp.pop %v1024
    %v1026 = vmul.f32 1.0, %v1025
    %v1027 = vxor.u32 %v1018, 2147483648
    %v1028 = vmul.f32 %v1027, 1.442695
    %v1029 = vpow.pop %v1028
    %v1030 = vadd.f32 %v1029, 1.0
    %v1031 = vrcp.pop %v1030
    %v1032 = vmul.f32 1.0, %v1031
    %v1033 = vtanh.pop %v1019
    %v1034 = vxor.u32 %v1020, 2147483648
    %v1035 = vmul.f32 %v1034, 1.442695
    %v1036 = vpow.pop %v1035
    %v1037 = vadd.f32 %v1036, 1.0
    %v1038 = vrcp.pop %v1037
    %v1039 = vmul.f32 1.0, %v1038
    %v1040 = vmul.f32 %v1032, %v866
    %v1041 = vmul.f32 %v1026, %v1033
    %v1042 = vadd.f32 %v1040, %v1041
    %v1043 = vtanh.pop %v1042
    %v1044 = vmul.f32 %v1039, %v1043
    %s1045 = sadd.s32 %s118, 4
    %v1046 = vstv %s1045
    %vm1047 = vcmp.gt.s32.totalorder %v53, %v1046
    %v1048 = vsel %vm1047, 1, 0
    %1049 = vset.pattern.permute.xlu0 0
    %1050 = vperm.xlu0 %1049, %v1048
    %v1051 = vpop.permute.xlu0 %1050
    %vm1052 = vcmp.eq.s32.totalorder %v1051, 1
    %v1053 = vsel %vm1052, %v1044, %v865
    %v1054 = vsel %vm1052, %v1042, %v866
    %v1055 = vsel %vm1052, %v1044, 0.0
    %s1056 = scalar_lea.vmem [#allocation9], 32
    %1057 = vst [vmem:[%s1056] sm:$0xff] %v1055
    %s1058 = scalar_lea.vmem [#allocation4], 160
    %v1059 = vld [vmem:[%s1058] sm:$0xff]
    %v1060 = vld [vmem:[%s1058 + $0x8] sm:$0xff]
    %v1061 = vld [vmem:[%s1058 + $0x10] sm:$0xff]
    %v1062 = vld [vmem:[%s1058 + $0x18] sm:$0xff]
    %1063 = vmatprep.subr.mxu0 %v115
    %1064 = vmatpush1.msra.mxu0 %v114
    %1065 = vmatprep.subr.mxu0 %v111
    %1066 = vmatpush1.msra.mxu0 %v110
    %1067 = vmatprep.subr.mxu0 %v107
    %1068 = vmatpush1.msra.mxu0 %v106
    %1069 = vmatprep.subr.mxu0 %v103
    %1070 = vmatpush1.msra.mxu0 %v102
    %1071 = vmatprep.subr.mxu0 %v99
    %1072 = vmatpush1.msra.mxu0 %v98
    %1073 = vmatprep.subr.mxu0 %v95
    %1074 = vmatpush1.msra.mxu0 %v94
    %1075 = vmatprep.subr.mxu0 %v91
    %1076 = vmatpush1.msra.mxu0 %v90
    %1077 = vmatprep.subr.mxu0 %v87
    %1078 = vmatpush1.msra.mxu0 %v86
    %1079 = vmatprep.subr.mxu0 %v83
    %1080 = vmatpush1.msra.mxu0 %v82
    %1081 = vmatprep.subr.mxu0 %v79
    %1082 = vmatpush1.msra.mxu0 %v78
    %1083 = vmatprep.subr.mxu0 %v75
    %1084 = vmatpush1.msra.mxu0 %v74
    %1085 = vmatprep.subr.mxu0 %v71
    %1086 = vmatpush1.msra.mxu0 %v70
    %1087 = vmatprep.subr.mxu0 %v67
    %1088 = vmatpush1.msra.mxu0 %v66
    %1089 = vmatprep.subr.mxu0 %v63
    %1090 = vmatpush1.msra.mxu0 %v62
    %1091 = vmatprep.subr.mxu0 %v59
    %1092 = vmatpush1.msra.mxu0 %v58
    %1093 = vmatprep.subr.mxu0 %v55
    %1094 = vmatpush1.msra.mxu0 %v54
    %1095 = vmatprep.subr.mxu0 0.0
    %1096 = vmatpush2.msra.mxu0 0.0
    %1097 = vmatprep.subr.mxu0 0.0
    %1098 = vmatpush2.msra.mxu0 0.0
    %1099 = vmatprep.subr.mxu0 0.0
    %1100 = vmatpush2.msra.mxu0 0.0
    %1101 = vmatprep.subr.mxu0 0.0
    %1102 = vmatpush2.msra.mxu0 0.0
    %1103 = vmatprep.subr.mxu0 0.0
    %1104 = vmatpush2.msra.mxu0 0.0
    %1105 = vmatprep.subr.mxu0 0.0
    %1106 = vmatpush2.msra.mxu0 0.0
    %1107 = vmatprep.subr.mxu0 0.0
    %1108 = vmatpush2.msra.mxu0 0.0
    %1109 = vmatprep.subr.mxu0 0.0
    %1110 = vmatpush2.msra.mxu0 0.0
    %1111 = vmatprep.subr.mxu0 0.0
    %1112 = vmatpush2.msra.mxu0 0.0
    %1113 = vmatprep.subr.mxu0 0.0
    %1114 = vmatpush2.msra.mxu0 0.0
    %1115 = vmatprep.subr.mxu0 0.0
    %1116 = vmatpush2.msra.mxu0 0.0
    %1117 = vmatprep.subr.mxu0 0.0
    %1118 = vmatpush2.msra.mxu0 0.0
    %1119 = vmatprep.subr.mxu0 0.0
    %1120 = vmatpush2.msra.mxu0 0.0
    %1121 = vmatprep.subr.mxu0 0.0
    %1122 = vmatpush2.msra.mxu0 0.0
    %1123 = vmatprep.subr.mxu0 0.0
    %1124 = vmatpush2.msra.mxu0 0.0
    %1125 = vmatprep.subr.mxu0 0.0
    %1126 = vmatpush2.msra.mxu0 0.0
    %1127 = vmatprep.mubr.f32.mxu0 0.0
    %1128 = vmatmul.mubr.f32.gmra.mxu0 %v1053
    %v1129 = vpop.f32.mrf.mxu0
    %v1130 = vadd.f32 0.0, %v1129
    %v1131 = vpop.f32.mrf.mxu0
    %v1132 = vadd.f32 0.0, %v1131
    %1133 = vdwg.mxu0
    %1134 = vmatprep.subr.mxu0 %v117
    %1135 = vmatpush1.msra.mxu0 %v116
    %1136 = vmatprep.subr.mxu0 %v113
    %1137 = vmatpush1.msra.mxu0 %v112
    %1138 = vmatprep.subr.mxu0 %v109
    %1139 = vmatpush1.msra.mxu0 %v108
    %1140 = vmatprep.subr.mxu0 %v105
    %1141 = vmatpush1.msra.mxu0 %v104
    %1142 = vmatprep.subr.mxu0 %v101
    %1143 = vmatpush1.msra.mxu0 %v100
    %1144 = vmatprep.subr.mxu0 %v97
    %1145 = vmatpush1.msra.mxu0 %v96
    %1146 = vmatprep.subr.mxu0 %v93
    %1147 = vmatpush1.msra.mxu0 %v92
    %1148 = vmatprep.subr.mxu0 %v89
    %1149 = vmatpush1.msra.mxu0 %v88
    %1150 = vmatprep.subr.mxu0 %v85
    %1151 = vmatpush1.msra.mxu0 %v84
    %1152 = vmatprep.subr.mxu0 %v81
    %1153 = vmatpush1.msra.mxu0 %v80
    %1154 = vmatprep.subr.mxu0 %v77
    %1155 = vmatpush1.msra.mxu0 %v76
    %1156 = vmatprep.subr.mxu0 %v73
    %1157 = vmatpush1.msra.mxu0 %v72
    %1158 = vmatprep.subr.mxu0 %v69
    %1159 = vmatpush1.msra.mxu0 %v68
    %1160 = vmatprep.subr.mxu0 %v65
    %1161 = vmatpush1.msra.mxu0 %v64
    %1162 = vmatprep.subr.mxu0 %v61
    %1163 = vmatpush1.msra.mxu0 %v60
    %1164 = vmatprep.subr.mxu0 %v57
    %1165 = vmatpush1.msra.mxu0 %v56
    %1166 = vmatprep.subr.mxu0 0.0
    %1167 = vmatpush2.msra.mxu0 0.0
    %1168 = vmatprep.subr.mxu0 0.0
    %1169 = vmatpush2.msra.mxu0 0.0
    %1170 = vmatprep.subr.mxu0 0.0
    %1171 = vmatpush2.msra.mxu0 0.0
    %1172 = vmatprep.subr.mxu0 0.0
    %1173 = vmatpush2.msra.mxu0 0.0
    %1174 = vmatprep.subr.mxu0 0.0
    %1175 = vmatpush2.msra.mxu0 0.0
    %1176 = vmatprep.subr.mxu0 0.0
    %1177 = vmatpush2.msra.mxu0 0.0
    %1178 = vmatprep.subr.mxu0 0.0
    %1179 = vmatpush2.msra.mxu0 0.0
    %1180 = vmatprep.subr.mxu0 0.0
    %1181 = vmatpush2.msra.mxu0 0.0
    %1182 = vmatprep.subr.mxu0 0.0
    %1183 = vmatpush2.msra.mxu0 0.0
    %1184 = vmatprep.subr.mxu0 0.0
    %1185 = vmatpush2.msra.mxu0 0.0
    %1186 = vmatprep.subr.mxu0 0.0
    %1187 = vmatpush2.msra.mxu0 0.0
    %1188 = vmatprep.subr.mxu0 0.0
    %1189 = vmatpush2.msra.mxu0 0.0
    %1190 = vmatprep.subr.mxu0 0.0
    %1191 = vmatpush2.msra.mxu0 0.0
    %1192 = vmatprep.subr.mxu0 0.0
    %1193 = vmatpush2.msra.mxu0 0.0
    %1194 = vmatprep.subr.mxu0 0.0
    %1195 = vmatpush2.msra.mxu0 0.0
    %1196 = vmatprep.subr.mxu0 0.0
    %1197 = vmatpush2.msra.mxu0 0.0
    %1198 = vmatprep.mubr.f32.mxu0 0.0
    %1199 = vmatmul.mubr.f32.gmra.mxu0 %v1053
    %v1200 = vpop.f32.mrf.mxu0
    %v1201 = vadd.f32 0.0, %v1200
    %v1202 = vpop.f32.mrf.mxu0
    %v1203 = vadd.f32 0.0, %v1202
    %1204 = vdwg.mxu0
    %v1205 = vadd.f32 %v1059, %v1130
    %v1206 = vadd.f32 %v1060, %v1132
    %v1207 = vadd.f32 %v1061, %v1201
    %v1208 = vadd.f32 %v1062, %v1203
    %v1209 = vxor.u32 %v1205, 2147483648
    %v1210 = vmul.f32 %v1209, 1.442695
    %v1211 = vpow.pop %v1210
    %v1212 = vadd.f32 %v1211, 1.0
    %v1213 = vrcp.pop %v1212
    %v1214 = vmul.f32 1.0, %v1213
    %v1215 = vxor.u32 %v1206, 2147483648
    %v1216 = vmul.f32 %v1215, 1.442695
    %v1217 = vpow.pop %v1216
    %v1218 = vadd.f32 %v1217, 1.0
    %v1219 = vrcp.pop %v1218
    %v1220 = vmul.f32 1.0, %v1219
    %v1221 = vtanh.pop %v1207
    %v1222 = vxor.u32 %v1208, 2147483648
    %v1223 = vmul.f32 %v1222, 1.442695
    %v1224 = vpow.pop %v1223
    %v1225 = vadd.f32 %v1224, 1.0
    %v1226 = vrcp.pop %v1225
    %v1227 = vmul.f32 1.0, %v1226
    %v1228 = vmul.f32 %v1220, %v1054
    %v1229 = vmul.f32 %v1214, %v1221
    %v1230 = vadd.f32 %v1228, %v1229
    %v1231 = vtanh.pop %v1230
    %v1232 = vmul.f32 %v1227, %v1231
    %s1233 = sadd.s32 %s118, 5
    %v1234 = vstv %s1233
    %vm1235 = vcmp.gt.s32.totalorder %v53, %v1234
    %v1236 = vsel %vm1235, 1, 0
    %1237 = vset.pattern.permute.xlu0 0
    %1238 = vperm.xlu0 %1237, %v1236
    %v1239 = vpop.permute.xlu0 %1238
    %vm1240 = vcmp.eq.s32.totalorder %v1239, 1
    %v1241 = vsel %vm1240, %v1232, %v1053
    %v1242 = vsel %vm1240, %v1230, %v1054
    %v1243 = vsel %vm1240, %v1232, 0.0
    %s1244 = scalar_lea.vmem [#allocation9], 40
    %1245 = vst [vmem:[%s1244] sm:$0xff] %v1243
    %s1246 = scalar_lea.vmem [#allocation4], 192
    %v1247 = vld [vmem:[%s1246] sm:$0xff]
    %v1248 = vld [vmem:[%s1246 + $0x8] sm:$0xff]
    %v1249 = vld [vmem:[%s1246 + $0x10] sm:$0xff]
    %v1250 = vld [vmem:[%s1246 + $0x18] sm:$0xff]
    %1251 = vmatprep.subr.mxu0 %v115
    %1252 = vmatpush1.msra.mxu0 %v114
    %1253 = vmatprep.subr.mxu0 %v111
    %1254 = vmatpush1.msra.mxu0 %v110
    %1255 = vmatprep.subr.mxu0 %v107
    %1256 = vmatpush1.msra.mxu0 %v106
    %1257 = vmatprep.subr.mxu0 %v103
    %1258 = vmatpush1.msra.mxu0 %v102
    %1259 = vmatprep.subr.mxu0 %v99
    %1260 = vmatpush1.msra.mxu0 %v98
    %1261 = vmatprep.subr.mxu0 %v95
    %1262 = vmatpush1.msra.mxu0 %v94
    %1263 = vmatprep.subr.mxu0 %v91
    %1264 = vmatpush1.msra.mxu0 %v90
    %1265 = vmatprep.subr.mxu0 %v87
    %1266 = vmatpush1.msra.mxu0 %v86
    %1267 = vmatprep.subr.mxu0 %v83
    %1268 = vmatpush1.msra.mxu0 %v82
    %1269 = vmatprep.subr.mxu0 %v79
    %1270 = vmatpush1.msra.mxu0 %v78
    %1271 = vmatprep.subr.mxu0 %v75
    %1272 = vmatpush1.msra.mxu0 %v74
    %1273 = vmatprep.subr.mxu0 %v71
    %1274 = vmatpush1.msra.mxu0 %v70
    %1275 = vmatprep.subr.mxu0 %v67
    %1276 = vmatpush1.msra.mxu0 %v66
    %1277 = vmatprep.subr.mxu0 %v63
    %1278 = vmatpush1.msra.mxu0 %v62
    %1279 = vmatprep.subr.mxu0 %v59
    %1280 = vmatpush1.msra.mxu0 %v58
    %1281 = vmatprep.subr.mxu0 %v55
    %1282 = vmatpush1.msra.mxu0 %v54
    %1283 = vmatprep.subr.mxu0 0.0
    %1284 = vmatpush2.msra.mxu0 0.0
    %1285 = vmatprep.subr.mxu0 0.0
    %1286 = vmatpush2.msra.mxu0 0.0
    %1287 = vmatprep.subr.mxu0 0.0
    %1288 = vmatpush2.msra.mxu0 0.0
    %1289 = vmatprep.subr.mxu0 0.0
    %1290 = vmatpush2.msra.mxu0 0.0
    %1291 = vmatprep.subr.mxu0 0.0
    %1292 = vmatpush2.msra.mxu0 0.0
    %1293 = vmatprep.subr.mxu0 0.0
    %1294 = vmatpush2.msra.mxu0 0.0
    %1295 = vmatprep.subr.mxu0 0.0
    %1296 = vmatpush2.msra.mxu0 0.0
    %1297 = vmatprep.subr.mxu0 0.0
    %1298 = vmatpush2.msra.mxu0 0.0
    %1299 = vmatprep.subr.mxu0 0.0
    %1300 = vmatpush2.msra.mxu0 0.0
    %1301 = vmatprep.subr.mxu0 0.0
    %1302 = vmatpush2.msra.mxu0 0.0
    %1303 = vmatprep.subr.mxu0 0.0
    %1304 = vmatpush2.msra.mxu0 0.0
    %1305 = vmatprep.subr.mxu0 0.0
    %1306 = vmatpush2.msra.mxu0 0.0
    %1307 = vmatprep.subr.mxu0 0.0
    %1308 = vmatpush2.msra.mxu0 0.0
    %1309 = vmatprep.subr.mxu0 0.0
    %1310 = vmatpush2.msra.mxu0 0.0
    %1311 = vmatprep.subr.mxu0 0.0
    %1312 = vmatpush2.msra.mxu0 0.0
    %1313 = vmatprep.subr.mxu0 0.0
    %1314 = vmatpush2.msra.mxu0 0.0
    %1315 = vmatprep.mubr.f32.mxu0 0.0
    %1316 = vmatmul.mubr.f32.gmra.mxu0 %v1241
    %v1317 = vpop.f32.mrf.mxu0
    %v1318 = vadd.f32 0.0, %v1317
    %v1319 = vpop.f32.mrf.mxu0
    %v1320 = vadd.f32 0.0, %v1319
    %1321 = vdwg.mxu0
    %1322 = vmatprep.subr.mxu0 %v117
    %1323 = vmatpush1.msra.mxu0 %v116
    %1324 = vmatprep.subr.mxu0 %v113
    %1325 = vmatpush1.msra.mxu0 %v112
    %1326 = vmatprep.subr.mxu0 %v109
    %1327 = vmatpush1.msra.mxu0 %v108
    %1328 = vmatprep.subr.mxu0 %v105
    %1329 = vmatpush1.msra.mxu0 %v104
    %1330 = vmatprep.subr.mxu0 %v101
    %1331 = vmatpush1.msra.mxu0 %v100
    %1332 = vmatprep.subr.mxu0 %v97
    %1333 = vmatpush1.msra.mxu0 %v96
    %1334 = vmatprep.subr.mxu0 %v93
    %1335 = vmatpush1.msra.mxu0 %v92
    %1336 = vmatprep.subr.mxu0 %v89
    %1337 = vmatpush1.msra.mxu0 %v88
    %1338 = vmatprep.subr.mxu0 %v85
    %1339 = vmatpush1.msra.mxu0 %v84
    %1340 = vmatprep.subr.mxu0 %v81
    %1341 = vmatpush1.msra.mxu0 %v80
    %1342 = vmatprep.subr.mxu0 %v77
    %1343 = vmatpush1.msra.mxu0 %v76
    %1344 = vmatprep.subr.mxu0 %v73
    %1345 = vmatpush1.msra.mxu0 %v72
    %1346 = vmatprep.subr.mxu0 %v69
    %1347 = vmatpush1.msra.mxu0 %v68
    %1348 = vmatprep.subr.mxu0 %v65
    %1349 = vmatpush1.msra.mxu0 %v64
    %1350 = vmatprep.subr.mxu0 %v61
    %1351 = vmatpush1.msra.mxu0 %v60
    %1352 = vmatprep.subr.mxu0 %v57
    %1353 = vmatpush1.msra.mxu0 %v56
    %1354 = vmatprep.subr.mxu0 0.0
    %1355 = vmatpush2.msra.mxu0 0.0
    %1356 = vmatprep.subr.mxu0 0.0
    %1357 = vmatpush2.msra.mxu0 0.0
    %1358 = vmatprep.subr.mxu0 0.0
    %1359 = vmatpush2.msra.mxu0 0.0
    %1360 = vmatprep.subr.mxu0 0.0
    %1361 = vmatpush2.msra.mxu0 0.0
    %1362 = vmatprep.subr.mxu0 0.0
    %1363 = vmatpush2.msra.mxu0 0.0
    %1364 = vmatprep.subr.mxu0 0.0
    %1365 = vmatpush2.msra.mxu0 0.0
    %1366 = vmatprep.subr.mxu0 0.0
    %1367 = vmatpush2.msra.mxu0 0.0
    %1368 = vmatprep.subr.mxu0 0.0
    %1369 = vmatpush2.msra.mxu0 0.0
    %1370 = vmatprep.subr.mxu0 0.0
    %1371 = vmatpush2.msra.mxu0 0.0
    %1372 = vmatprep.subr.mxu0 0.0
    %1373 = vmatpush2.msra.mxu0 0.0
    %1374 = vmatprep.subr.mxu0 0.0
    %1375 = vmatpush2.msra.mxu0 0.0
    %1376 = vmatprep.subr.mxu0 0.0
    %1377 = vmatpush2.msra.mxu0 0.0
    %1378 = vmatprep.subr.mxu0 0.0
    %1379 = vmatpush2.msra.mxu0 0.0
    %1380 = vmatprep.subr.mxu0 0.0
    %1381 = vmatpush2.msra.mxu0 0.0
    %1382 = vmatprep.subr.mxu0 0.0
    %1383 = vmatpush2.msra.mxu0 0.0
    %1384 = vmatprep.subr.mxu0 0.0
    %1385 = vmatpush2.msra.mxu0 0.0
    %1386 = vmatprep.mubr.f32.mxu0 0.0
    %1387 = vmatmul.mubr.f32.gmra.mxu0 %v1241
    %v1388 = vpop.f32.mrf.mxu0
    %v1389 = vadd.f32 0.0, %v1388
    %v1390 = vpop.f32.mrf.mxu0
    %v1391 = vadd.f32 0.0, %v1390
    %1392 = vdwg.mxu0
    %v1393 = vadd.f32 %v1247, %v1318
    %v1394 = vadd.f32 %v1248, %v1320
    %v1395 = vadd.f32 %v1249, %v1389
    %v1396 = vadd.f32 %v1250, %v1391
    %v1397 = vxor.u32 %v1393, 2147483648
    %v1398 = vmul.f32 %v1397, 1.442695
    %v1399 = vpow.pop %v1398
    %v1400 = vadd.f32 %v1399, 1.0
    %v1401 = vrcp.pop %v1400
    %v1402 = vmul.f32 1.0, %v1401
    %v1403 = vxor.u32 %v1394, 2147483648
    %v1404 = vmul.f32 %v1403, 1.442695
    %v1405 = vpow.pop %v1404
    %v1406 = vadd.f32 %v1405, 1.0
    %v1407 = vrcp.pop %v1406
    %v1408 = vmul.f32 1.0, %v1407
    %v1409 = vtanh.pop %v1395
    %v1410 = vxor.u32 %v1396, 2147483648
    %v1411 = vmul.f32 %v1410, 1.442695
    %v1412 = vpow.pop %v1411
    %v1413 = vadd.f32 %v1412, 1.0
    %v1414 = vrcp.pop %v1413
    %v1415 = vmul.f32 1.0, %v1414
    %v1416 = vmul.f32 %v1408, %v1242
    %v1417 = vmul.f32 %v1402, %v1409
    %v1418 = vadd.f32 %v1416, %v1417
    %v1419 = vtanh.pop %v1418
    %v1420 = vmul.f32 %v1415, %v1419
    %s1421 = sadd.s32 %s118, 6
    %v1422 = vstv %s1421
    %vm1423 = vcmp.gt.s32.totalorder %v53, %v1422
    %v1424 = vsel %vm1423, 1, 0
    %1425 = vset.pattern.permute.xlu0 0
    %1426 = vperm.xlu0 %1425, %v1424
    %v1427 = vpop.permute.xlu0 %1426
    %vm1428 = vcmp.eq.s32.totalorder %v1427, 1
    %v1429 = vsel %vm1428, %v1420, %v1241
    %v1430 = vsel %vm1428, %v1418, %v1242
    %v1431 = vsel %vm1428, %v1420, 0.0
    %s1432 = scalar_lea.vmem [#allocation9], 48
    %1433 = vst [vmem:[%s1432] sm:$0xff] %v1431
    %s1434 = scalar_lea.vmem [#allocation4], 224
    %v1435 = vld [vmem:[%s1434] sm:$0xff]
    %v1436 = vld [vmem:[%s1434 + $0x8] sm:$0xff]
    %v1437 = vld [vmem:[%s1434 + $0x10] sm:$0xff]
    %v1438 = vld [vmem:[%s1434 + $0x18] sm:$0xff]
    %1439 = vmatprep.subr.mxu0 %v115
    %1440 = vmatpush1.msra.mxu0 %v114
    %1441 = vmatprep.subr.mxu0 %v111
    %1442 = vmatpush1.msra.mxu0 %v110
    %1443 = vmatprep.subr.mxu0 %v107
    %1444 = vmatpush1.msra.mxu0 %v106
    %1445 = vmatprep.subr.mxu0 %v103
    %1446 = vmatpush1.msra.mxu0 %v102
    %1447 = vmatprep.subr.mxu0 %v99
    %1448 = vmatpush1.msra.mxu0 %v98
    %1449 = vmatprep.subr.mxu0 %v95
    %1450 = vmatpush1.msra.mxu0 %v94
    %1451 = vmatprep.subr.mxu0 %v91
    %1452 = vmatpush1.msra.mxu0 %v90
    %1453 = vmatprep.subr.mxu0 %v87
    %1454 = vmatpush1.msra.mxu0 %v86
    %1455 = vmatprep.subr.mxu0 %v83
    %1456 = vmatpush1.msra.mxu0 %v82
    %1457 = vmatprep.subr.mxu0 %v79
    %1458 = vmatpush1.msra.mxu0 %v78
    %1459 = vmatprep.subr.mxu0 %v75
    %1460 = vmatpush1.msra.mxu0 %v74
    %1461 = vmatprep.subr.mxu0 %v71
    %1462 = vmatpush1.msra.mxu0 %v70
    %1463 = vmatprep.subr.mxu0 %v67
    %1464 = vmatpush1.msra.mxu0 %v66
    %1465 = vmatprep.subr.mxu0 %v63
    %1466 = vmatpush1.msra.mxu0 %v62
    %1467 = vmatprep.subr.mxu0 %v59
    %1468 = vmatpush1.msra.mxu0 %v58
    %1469 = vmatprep.subr.mxu0 %v55
    %1470 = vmatpush1.msra.mxu0 %v54
    %1471 = vmatprep.subr.mxu0 0.0
    %1472 = vmatpush2.msra.mxu0 0.0
    %1473 = vmatprep.subr.mxu0 0.0
    %1474 = vmatpush2.msra.mxu0 0.0
    %1475 = vmatprep.subr.mxu0 0.0
    %1476 = vmatpush2.msra.mxu0 0.0
    %1477 = vmatprep.subr.mxu0 0.0
    %1478 = vmatpush2.msra.mxu0 0.0
    %1479 = vmatprep.subr.mxu0 0.0
    %1480 = vmatpush2.msra.mxu0 0.0
    %1481 = vmatprep.subr.mxu0 0.0
    %1482 = vmatpush2.msra.mxu0 0.0
    %1483 = vmatprep.subr.mxu0 0.0
    %1484 = vmatpush2.msra.mxu0 0.0
    %1485 = vmatprep.subr.mxu0 0.0
    %1486 = vmatpush2.msra.mxu0 0.0
    %1487 = vmatprep.subr.mxu0 0.0
    %1488 = vmatpush2.msra.mxu0 0.0
    %1489 = vmatprep.subr.mxu0 0.0
    %1490 = vmatpush2.msra.mxu0 0.0
    %1491 = vmatprep.subr.mxu0 0.0
    %1492 = vmatpush2.msra.mxu0 0.0
    %1493 = vmatprep.subr.mxu0 0.0
    %1494 = vmatpush2.msra.mxu0 0.0
    %1495 = vmatprep.subr.mxu0 0.0
    %1496 = vmatpush2.msra.mxu0 0.0
    %1497 = vmatprep.subr.mxu0 0.0
    %1498 = vmatpush2.msra.mxu0 0.0
    %1499 = vmatprep.subr.mxu0 0.0
    %1500 = vmatpush2.msra.mxu0 0.0
    %1501 = vmatprep.subr.mxu0 0.0
    %1502 = vmatpush2.msra.mxu0 0.0
    %1503 = vmatprep.mubr.f32.mxu0 0.0
    %1504 = vmatmul.mubr.f32.gmra.mxu0 %v1429
    %v1505 = vpop.f32.mrf.mxu0
    %v1506 = vadd.f32 0.0, %v1505
    %v1507 = vpop.f32.mrf.mxu0
    %v1508 = vadd.f32 0.0, %v1507
    %1509 = vdwg.mxu0
    %1510 = vmatprep.subr.mxu0 %v117
    %1511 = vmatpush1.msra.mxu0 %v116
    %1512 = vmatprep.subr.mxu0 %v113
    %1513 = vmatpush1.msra.mxu0 %v112
    %1514 = vmatprep.subr.mxu0 %v109
    %1515 = vmatpush1.msra.mxu0 %v108
    %1516 = vmatprep.subr.mxu0 %v105
    %1517 = vmatpush1.msra.mxu0 %v104
    %1518 = vmatprep.subr.mxu0 %v101
    %1519 = vmatpush1.msra.mxu0 %v100
    %1520 = vmatprep.subr.mxu0 %v97
    %1521 = vmatpush1.msra.mxu0 %v96
    %1522 = vmatprep.subr.mxu0 %v93
    %1523 = vmatpush1.msra.mxu0 %v92
    %1524 = vmatprep.subr.mxu0 %v89
    %1525 = vmatpush1.msra.mxu0 %v88
    %1526 = vmatprep.subr.mxu0 %v85
    %1527 = vmatpush1.msra.mxu0 %v84
    %1528 = vmatprep.subr.mxu0 %v81
    %1529 = vmatpush1.msra.mxu0 %v80
    %1530 = vmatprep.subr.mxu0 %v77
    %1531 = vmatpush1.msra.mxu0 %v76
    %1532 = vmatprep.subr.mxu0 %v73
    %1533 = vmatpush1.msra.mxu0 %v72
    %1534 = vmatprep.subr.mxu0 %v69
    %1535 = vmatpush1.msra.mxu0 %v68
    %1536 = vmatprep.subr.mxu0 %v65
    %1537 = vmatpush1.msra.mxu0 %v64
    %1538 = vmatprep.subr.mxu0 %v61
    %1539 = vmatpush1.msra.mxu0 %v60
    %1540 = vmatprep.subr.mxu0 %v57
    %1541 = vmatpush1.msra.mxu0 %v56
    %1542 = vmatprep.subr.mxu0 0.0
    %1543 = vmatpush2.msra.mxu0 0.0
    %1544 = vmatprep.subr.mxu0 0.0
    %1545 = vmatpush2.msra.mxu0 0.0
    %1546 = vmatprep.subr.mxu0 0.0
    %1547 = vmatpush2.msra.mxu0 0.0
    %1548 = vmatprep.subr.mxu0 0.0
    %1549 = vmatpush2.msra.mxu0 0.0
    %1550 = vmatprep.subr.mxu0 0.0
    %1551 = vmatpush2.msra.mxu0 0.0
    %1552 = vmatprep.subr.mxu0 0.0
    %1553 = vmatpush2.msra.mxu0 0.0
    %1554 = vmatprep.subr.mxu0 0.0
    %1555 = vmatpush2.msra.mxu0 0.0
    %1556 = vmatprep.subr.mxu0 0.0
    %1557 = vmatpush2.msra.mxu0 0.0
    %1558 = vmatprep.subr.mxu0 0.0
    %1559 = vmatpush2.msra.mxu0 0.0
    %1560 = vmatprep.subr.mxu0 0.0
    %1561 = vmatpush2.msra.mxu0 0.0
    %1562 = vmatprep.subr.mxu0 0.0
    %1563 = vmatpush2.msra.mxu0 0.0
    %1564 = vmatprep.subr.mxu0 0.0
    %1565 = vmatpush2.msra.mxu0 0.0
    %1566 = vmatprep.subr.mxu0 0.0
    %1567 = vmatpush2.msra.mxu0 0.0
    %1568 = vmatprep.subr.mxu0 0.0
    %1569 = vmatpush2.msra.mxu0 0.0
    %1570 = vmatprep.subr.mxu0 0.0
    %1571 = vmatpush2.msra.mxu0 0.0
    %1572 = vmatprep.subr.mxu0 0.0
    %1573 = vmatpush2.msra.mxu0 0.0
    %1574 = vmatprep.mubr.f32.mxu0 0.0
    %1575 = vmatmul.mubr.f32.gmra.mxu0 %v1429
    %v1576 = vpop.f32.mrf.mxu0
    %v1577 = vadd.f32 0.0, %v1576
    %v1578 = vpop.f32.mrf.mxu0
    %v1579 = vadd.f32 0.0, %v1578
    %1580 = vdwg.mxu0
    %v1581 = vadd.f32 %v1435, %v1506
    %v1582 = vadd.f32 %v1436, %v1508
    %v1583 = vadd.f32 %v1437, %v1577
    %v1584 = vadd.f32 %v1438, %v1579
    %v1585 = vxor.u32 %v1581, 2147483648
    %v1586 = vmul.f32 %v1585, 1.442695
    %v1587 = vpow.pop %v1586
    %v1588 = vadd.f32 %v1587, 1.0
    %v1589 = vrcp.pop %v1588
    %v1590 = vmul.f32 1.0, %v1589
    %v1591 = vxor.u32 %v1582, 2147483648
    %v1592 = vmul.f32 %v1591, 1.442695
    %v1593 = vpow.pop %v1592
    %v1594 = vadd.f32 %v1593, 1.0
    %v1595 = vrcp.pop %v1594
    %v1596 = vmul.f32 1.0, %v1595
    %v1597 = vtanh.pop %v1583
    %v1598 = vxor.u32 %v1584, 2147483648
    %v1599 = vmul.f32 %v1598, 1.442695
    %v1600 = vpow.pop %v1599
    %v1601 = vadd.f32 %v1600, 1.0
    %v1602 = vrcp.pop %v1601
    %v1603 = vmul.f32 1.0, %v1602
    %v1604 = vmul.f32 %v1596, %v1430
    %v1605 = vmul.f32 %v1590, %v1597
    %v1606 = vadd.f32 %v1604, %v1605
    %v1607 = vtanh.pop %v1606
    %v1608 = vmul.f32 %v1603, %v1607
    %s1609 = sadd.s32 %s118, 7
    %v1610 = vstv %s1609
    %vm1611 = vcmp.gt.s32.totalorder %v53, %v1610
    %v1612 = vsel %vm1611, 1, 0
    %1613 = vset.pattern.permute.xlu0 0
    %1614 = vperm.xlu0 %1613, %v1612
    %v1615 = vpop.permute.xlu0 %1614
    %vm1616 = vcmp.eq.s32.totalorder %v1615, 1
    %v1617 = vsel %vm1616, %v1608, %v1429
    %v1618 = vsel %vm1616, %v1606, %v1430
    %v1619 = vsel %vm1616, %v1608, 0.0
    %s1620 = scalar_lea.vmem [#allocation9], 56
    %1621 = vst [vmem:[%s1620] sm:$0xff] %v1619
    %1622 = vst [vmem:[#allocation2] sm:$0xff] %v1617
    %1623 = vst [vmem:[#allocation3] sm:$0xff] %v1618
    // Predicated region
    $region26: #{tpu_custom_call.1} parent=1 // pred_check
      %p1624 = pneg %p47
    $region27: #{tpu_custom_call.1} parent=1 // pred_check_branch
      %1626 = sbr.rel (%p1624) target = $region29
    $region28: #{tpu_custom_call.1} parent=1 // pred_region
      %v1627 = vld [vmem:[#allocation2] sm:$0xff]
      %1628 = vst [vmem:[#allocation10] sm:$0xff] %v1627
      %v1629 = vld [vmem:[#allocation3] sm:$0xff]
      %1630 = vst [vmem:[#allocation12] sm:$0xff] %v1629
    $region29: #{tpu_custom_call.1} parent=1 // pred_fallthru
      _
    // Predicated region
    $region30: #{tpu_custom_call.1} parent=1 // pred_check
      _
    $region31: #{tpu_custom_call.1} parent=1 // pred_check_branch
      %1632 = sbr.rel (0) target = $region33
    $region32: #{tpu_custom_call.1} parent=1 // pred_region
      %s1634 = ssub.s32 1024, 1024
      %1635 = vsyncadd [#allocation6], %s1634
      %s1636 = sshll.u32 [#allocation9], 4
      %s1637 = int_to_ptr.vmem [resolvable:$true] %s1636
      %1642 = dma.vmem_to_hbm [thread:$0]  %s1637, 1024, %s3, [#allocation6], 128, 128, 8
    $region33: #{tpu_custom_call.1} parent=1 // pred_fallthru
      _
    // Predicated region
    $region34: #{tpu_custom_call.1} parent=1 // pred_check
      _
    $region35: #{tpu_custom_call.1} parent=1 // pred_check_branch
      %1644 = sbr.rel (0) target = $region37
    $region36: #{tpu_custom_call.1} parent=1 // pred_region
      %s1646 = ssub.s32 128, 128
      %1647 = vsyncadd [#allocation11], %s1646
      %s1649 = sshll.u32 [#allocation10], 4
      %s1650 = int_to_ptr.vmem [resolvable:$true] %s1649
      %1652 = dma.vmem_to_hbm [thread:$0]  %s1650, 128, %s4, [#allocation11]
    $region37: #{tpu_custom_call.1} parent=1 // pred_fallthru
      _
    // Predicated region
    $region38: #{tpu_custom_call.1} parent=1 // pred_check
      _
    $region39: #{tpu_custom_call.1} parent=1 // pred_check_branch
      %1654 = sbr.rel (0) target = $region41
    $region40: #{tpu_custom_call.1} parent=1 // pred_region
      %s1656 = ssub.s32 128, 128
      %1657 = vsyncadd [#allocation11], %s1656
      %s1659 = sshll.u32 [#allocation12], 4
      %s1660 = int_to_ptr.vmem [resolvable:$true] %s1659
      %1662 = dma.vmem_to_hbm [thread:$0]  %s1660, 128, %s5, [#allocation11]
    $region41: #{tpu_custom_call.1} parent=1 // pred_fallthru
      _
    // Predicated region
    $region42: #{tpu_custom_call.1} parent=1 // pred_check
      _
    $region43: #{tpu_custom_call.1} parent=1 // pred_check_branch
      %1664 = sbr.rel (0) target = $region45
    $region44: #{tpu_custom_call.1} parent=1 // pred_region
      %1665 = dma.done [#allocation6], 1024
    $region45: #{tpu_custom_call.1} parent=1 // pred_fallthru
      _
    // Predicated region
    $region46: #{tpu_custom_call.1} parent=1 // pred_check
      _
    $region47: #{tpu_custom_call.1} parent=1 // pred_check_branch
      %1667 = sbr.rel (0) target = $region49
    $region48: #{tpu_custom_call.1} parent=1 // pred_region
      %1668 = dma.done [#allocation11], 128
    $region49: #{tpu_custom_call.1} parent=1 // pred_fallthru
      _
    // Predicated region
    $region50: #{tpu_custom_call.1} parent=1 // pred_check
      _
    $region51: #{tpu_custom_call.1} parent=1 // pred_check_branch
      %1670 = sbr.rel (0) target = $region53
    $region52: #{tpu_custom_call.1} parent=1 // pred_region
      %1671 = dma.done [#allocation11], 128
    $region53: #{tpu_custom_call.1} parent=1 // pred_fallthru
      _
    %1672 = vsyncpa [#allocation5], 1
    %1673 = vsyncpa [#allocation8], 1
    %1674 = vsyncpa [#allocation6], 1
    %1675 = vsyncpa [#allocation11], 1

</llo_original>
